<compile_context>
chip_gen: v7x
topology: tpu7x:2x2x1
jax: 0.10.0
libtpu: 0.0.40
codegen_flags: <defaults>
</compile_context>

<pallas_src>
import functools
import math

import jax
import jax.numpy as jnp
from jax.experimental import pallas as pl
from jax.experimental.pallas import tpu as pltpu

EPS = 1e-6
NEG_INF = -1e9
OUT_PAD = 128                       # lane-dense padding for the final projection


# ----------------------------------------------------------------------------
# helpers usable inside kernels
# ----------------------------------------------------------------------------
def _silu(x):
    return x * jax.nn.sigmoid(x)


def _rms_normalize(x):
    ms = jnp.mean(x * x, axis=-1, keepdims=True)
    return x * jax.lax.rsqrt(ms + EPS)


def _mm(a, w):
    """bf16 MXU matmul with f32 accumulation."""
    return jnp.dot(a.astype(jnp.bfloat16), w.astype(jnp.bfloat16),
                   preferred_element_type=jnp.float32)


# ----------------------------------------------------------------------------
# runtime capability probes (keep the script robust across JAX/TPU versions)
# ----------------------------------------------------------------------------
_BUFFERED_OK = None
_ROLL_OK = None
_VMEM_LIMIT = None


def _single_buffer_supported():
    """Probe whether pipeline_mode=pl.Buffered(1) works for grid-invariant inputs."""
    global _BUFFERED_OK
    if _BUFFERED_OK is None:
        try:
            def _k(s_ref, x_ref, w_ref, o_ref):
                del s_ref
                o_ref[...] = x_ref[...] + w_ref[...]
            wspec = pl.BlockSpec((8, 128), lambda i, s: (0, 0),
                                 pipeline_mode=pl.Buffered(1))
            gs = pltpu.PrefetchScalarGridSpec(
                num_scalar_prefetch=1, grid=(2,),
                in_specs=[pl.BlockSpec((8, 128), lambda i, s: (0, 0)), wspec],
                out_specs=pl.BlockSpec((8, 128), lambda i, s: (0, 0)))
            y = pl.pallas_call(
                _k, out_shape=jax.ShapeDtypeStruct((8, 128), jnp.float32),
                grid_spec=gs,
            )(jnp.zeros((2,), jnp.int32),
              jnp.zeros((8, 128), jnp.float32),
              jnp.ones((8, 128), jnp.float32))
            _BUFFERED_OK = bool(jnp.all(jax.block_until_ready(y) == 1.0))
        except Exception:
            _BUFFERED_OK = False
    return _BUFFERED_OK


def _sublane_roll_supported():
    """Probe pltpu.roll along the sublane (time) axis, incl. direction check."""
    global _ROLL_OK
    if _ROLL_OK is None:
        try:
            def _k(x_ref, o_ref):
                o_ref[...] = pltpu.roll(x_ref[...], shift=1, axis=0)
            x = jnp.arange(16 * 128, dtype=jnp.float32).reshape(16, 128)
            y = pl.pallas_call(
                _k, out_shape=jax.ShapeDtypeStruct((16, 128), jnp.float32))(x)
            _ROLL_OK = bool(jnp.allclose(jax.block_until_ready(y),
                                         jnp.roll(x, 1, axis=0)))
        except Exception:
            _ROLL_OK = False
    return _ROLL_OK


def _vmem_limit():
    """Generation-dependent VMEM budget: 3/4 of the chip's VMEM capacity."""
    global _VMEM_LIMIT
    if _VMEM_LIMIT is None:
        try:
            cap = int(pltpu.get_tpu_info().vmem_capacity_bytes)
        except Exception:
            cap = 128 * 1024 * 1024
        _VMEM_LIMIT = min((cap * 3) // 4, 100 * 1024 * 1024)
    return _VMEM_LIMIT


def _wspec(shape):
    """BlockSpec for a grid-invariant weight (single-buffered when supported)."""
    zeros = (0,) * len(shape)
    index_map = lambda b, lens: zeros
    if _single_buffer_supported():
        return pl.BlockSpec(tuple(shape), index_map,
                            pipeline_mode=pl.Buffered(1))
    return pl.BlockSpec(tuple(shape), index_map)


def _pick_q_tile(T):
    """Largest query tile (<=256) that divides T; tiny shapes exercise the loop."""
    for cand in (256, 128, 64, 32, 8):
        if T % cand == 0:
            return cand
    return T


# ----------------------------------------------------------------------------
# Kernel 1: prenet ResnetBlock1D
# ----------------------------------------------------------------------------
def _prenet_kernel(lens_ref, x_ref, t_ref,
                   w1_ref, b1_ref, g1_ref,
                   w2_ref, b2_ref, g2_ref,
                   wm_ref, bm_ref,
                   wr_ref, br_ref,
                   o_ref, *, use_roll):
    x = x_ref[0].astype(jnp.float32)    # (T, Cin)
    temb = t_ref[0]                     # (1, H)
    T = x.shape[0]

    length = lens_ref[pl.program_id(0)]
    row = jax.lax.broadcasted_iota(jnp.int32, (T, 1), 0)
    m = (row < length).astype(jnp.float32)                  # (T, 1)
    not_first = (row >= 1).astype(jnp.float32)
    not_last = (row < T - 1).astype(jnp.float32)

    def conv3(inp, w_ref, b_ref):
        # Conv1d(kernel=3, padding=1) in time-major layout.
        if use_roll:
            prev = pltpu.roll(inp, shift=1, axis=0) * not_first       # x[t-1]
            nxt = pltpu.roll(inp, shift=T - 1, axis=0) * not_last     # x[t+1]
        else:
            zero = jnp.zeros((1, inp.shape[1]), inp.dtype)
            prev = jnp.concatenate([zero, inp[:-1]], axis=0)
            nxt = jnp.concatenate([inp[1:], zero], axis=0)
        return (_mm(prev, w_ref[0]) + _mm(inp, w_ref[1]) + _mm(nxt, w_ref[2])
                + b_ref[...])

    xm = x * m
    # Block1D #1
    h = conv3(xm, w1_ref, b1_ref)
    h = _rms_normalize(h) * g1_ref[...]
    h = _silu(h) * m
    # += mlp(t) = Linear(SiLU(t)), broadcast over time
    h = h + (_mm(_silu(temb), wm_ref[...]) + bm_ref[...])
    # Block1D #2
    h = conv3(h * m, w2_ref, b2_ref)
    h = _rms_normalize(h) * g2_ref[...]
    h = _silu(h) * m
    # residual 1x1 conv on x * mask
    res = _mm(xm, wr_ref[...]) + br_ref[...]
    o_ref[0] = (h + res).astype(o_ref.dtype)


# ----------------------------------------------------------------------------
# Kernel 2: one DiT Encoder block (adaRMSNorms + register-conditioned MHA +
#           SwiGLU FFN), query-tiled attention + fused skip add.
# ----------------------------------------------------------------------------
def _encoder_kernel(lens_ref, *refs, n_heads, q_tile, has_skip):
    if has_skip:
        x_ref, skip_ref = refs[0], refs[1]
        rest = refs[2:]
    else:
        x_ref, skip_ref = refs[0], None
        rest = refs[1:]
    (reg_ref, t_ref,
     n1w_ref, n1b_ref, nrw_ref, nrb_ref,
     wq_ref, bq_ref, wkv_ref, bkv_ref, wo_ref, bo_ref,
     n2w_ref, n2b_ref,
     wfa_ref, bfa_ref, wfb_ref, bfb_ref, wf2_ref, bf2_ref,
     o_ref, q_scr, x_scr) = rest

    x = x_ref[0].astype(jnp.float32)            # (T, H)
    if has_skip:
        x = x + skip_ref[0].astype(jnp.float32)  # fused skip-connection add
    reg = reg_ref[0].astype(jnp.float32)        # (R, H)
    temb = t_ref[0]                             # (1, H)
    T, H = x.shape
    R = reg.shape[0]
    dh = H // n_heads
    scale = 1.0 / math.sqrt(dh)

    length = lens_ref[pl.program_id(0)]
    row = jax.lax.broadcasted_iota(jnp.int32, (T, 1), 0)
    m = (row < length).astype(jnp.float32)                       # (T, 1)

    x = x * m
    x_scr[...] = x                                               # residual stream

    # adaRMSNorm scale vectors (tiny (1,H) matmuls)
    s1 = _mm(temb, n1w_ref[...]) + n1b_ref[...]
    sr = _mm(temb, nrw_ref[...]) + nrb_ref[...]
    s2 = _mm(temb, n2w_ref[...]) + n2b_ref[...]

    attn_in = _rms_normalize(x) * (1.0 + s1)
    reg_n = _rms_normalize(reg) * (1.0 + sr)

    # Q over the full sequence (deep MXU matmul), 1/sqrt(dh) folded in.
    q_scr[...] = (_mm(attn_in, wq_ref[...]) + bq_ref[...]) * scale

    # fused KV projection; registers and x stay separate KV segments
    kv_x = _mm(attn_in, wkv_ref[...]) + bkv_ref[...]             # (T, 2H)
    kv_r = _mm(reg_n, wkv_ref[...]) + bkv_ref[...]               # (R, 2H)

    def to_heads(a):                                             # (S,H)->(nh,S,dh)
        s = a.shape[0]
        return jnp.swapaxes(a.reshape(s, n_heads, dh), 0, 1).astype(jnp.bfloat16)

    k_x = to_heads(kv_x[:, :H])
    v_x = to_heads(kv_x[:, H:])
    k_r = to_heads(kv_r[:, :H])
    v_r = to_heads(kv_r[:, H:])

    # additive key mask for the x segment; register keys are always valid
    col = jax.lax.broadcasted_iota(jnp.int32, (1, 1, T), 2)
    kbias = jnp.where(col < length, 0.0, NEG_INF)                # (1, 1, T)

    n_q = T // q_tile

    def qtile_body(qi, carry):
        start = pl.multiple_of(qi * q_tile, q_tile)
        rows = jax.lax.broadcasted_iota(jnp.int32, (q_tile, 1), 0) + start
        m_t = (rows < length).astype(jnp.float32)                # (TQ, 1)

        q_t = q_scr[pl.ds(start, q_tile), :]                     # (TQ, H) f32
        q3 = to_heads(q_t)                                       # (nh, TQ, dh)

        s_r = jnp.einsum('hqd,hkd->hqk', q3, k_r,
                         preferred_element_type=jnp.float32)     # (nh, TQ, R)
        s_x = jnp.einsum('hqd,hkd->hqk', q3, k_x,
                         preferred_element_type=jnp.float32) + kbias
        mx = jnp.maximum(jnp.max(s_r, axis=-1, keepdims=True),
                         jnp.max(s_x, axis=-1, keepdims=True))
        e_r = jnp.exp(s_r - mx)
        e_x = jnp.exp(s_x - mx)
        denom = (jnp.sum(e_r, axis=-1, keepdims=True)
                 + jnp.sum(e_x, axis=-1, keepdims=True))
        o3 = (jnp.einsum('hqk,hkd->hqd', e_r.astype(jnp.bfloat16), v_r,
                         preferred_element_type=jnp.float32)
              + jnp.einsum('hqk,hkd->hqd', e_x.astype(jnp.bfloat16), v_x,
                           preferred_element_type=jnp.float32))
        o3 = o3 * pl.reciprocal(denom, approx=True)              # (nh, TQ, dh)

        # merge heads back onto the lane axis, then one full-H projection
        merged = jnp.swapaxes(o3, 0, 1).reshape(q_tile, H)
        attn_t = _mm(merged, wo_ref[...]) + bo_ref[...]

        x_t = x_scr[pl.ds(start, q_tile), :]                     # masked residual
        x2 = attn_t + x_t

        # adaRMSNorm + SwiGLU FFN (split gate/value weights, 1x1 convs)
        ff_in = _rms_normalize(x2) * (1.0 + s2)
        ff_m = ff_in * m_t
        g = ((_mm(ff_m, wfa_ref[...]) + bfa_ref[...])
             * _silu(_mm(ff_m, wfb_ref[...]) + bfb_ref[...]))
        ffo = _mm(g * m_t, wf2_ref[...]) + bf2_ref[...]
        out_t = (ffo + x2) * m_t
        o_ref[0, pl.ds(start, q_tile), :] = out_t.astype(o_ref.dtype)
        return carry

    jax.lax.fori_loop(0, n_q, qtile_body, 0)


# ----------------------------------------------------------------------------
# Kernel 3: final RMSNorm + lane-padded 1x1 output projection
# ----------------------------------------------------------------------------
def _final_kernel(lens_ref, x_ref, g_ref, wp_ref, bp_ref, o_ref):
    x = x_ref[0].astype(jnp.float32)    # (T, H)
    T = x.shape[0]
    length = lens_ref[pl.program_id(0)]
    row = jax.lax.broadcasted_iota(jnp.int32, (T, 1), 0)
    m = (row < length).astype(jnp.float32)
    y = _rms_normalize(x) * g_ref[...]
    out = _mm(y * m, wp_ref[...]) + bp_ref[...]                  # (T, OUT_PAD)
    o_ref[0] = out.astype(o_ref.dtype)


# ----------------------------------------------------------------------------
# pallas_call wrappers
# ----------------------------------------------------------------------------
def _run_prenet(p, lens, xin_t, temb3):
    B, T, Cin = xin_t.shape
    H = p['conv1_b'].shape[-1]
    use_roll = _sublane_roll_supported()
    flops = 2 * B * T * (4 * Cin * H + 3 * H * H) + 2 * B * H * H
    bytes_acc = (4 * B * T * Cin + 2 * B * T * H + 4 * B * H
                 + 2 * (4 * Cin * H + 4 * H * H))
    grid_spec = pltpu.PrefetchScalarGridSpec(
        num_scalar_prefetch=1,
        grid=(B,),
        in_specs=[
            pl.BlockSpec((1, T, Cin), lambda b, lens: (b, 0, 0)),
            pl.BlockSpec((1, 1, H), lambda b, lens: (b, 0, 0)),
            _wspec(p['conv1_w'].shape), _wspec(p['conv1_b'].shape), _wspec(p['norm1_g'].shape),
            _wspec(p['conv2_w'].shape), _wspec(p['conv2_b'].shape), _wspec(p['norm2_g'].shape),
            _wspec(p['mlp_w'].shape), _wspec(p['mlp_b'].shape),
            _wspec(p['res_w'].shape), _wspec(p['res_b'].shape),
        ],
        out_specs=pl.BlockSpec((1, T, H), lambda b, lens: (b, 0, 0)),
    )
    return pl.pallas_call(
        functools.partial(_prenet_kernel, use_roll=use_roll),
        out_shape=jax.ShapeDtypeStruct((B, T, H), jnp.bfloat16),
        grid_spec=grid_spec,
        compiler_params=pltpu.CompilerParams(
            dimension_semantics=("parallel",), vmem_limit_bytes=_vmem_limit()),
        cost_estimate=pl.CostEstimate(flops=int(flops),
                                      transcendentals=int(3 * B * T * H),
                                      bytes_accessed=int(bytes_acc)),
    )(lens, xin_t, temb3,
      p['conv1_w'], p['conv1_b'], p['norm1_g'],
      p['conv2_w'], p['conv2_b'], p['norm2_g'],
      p['mlp_w'], p['mlp_b'], p['res_w'], p['res_b'])


def _run_encoder_block(blk, lens, x_t, reg_t, temb3, skip_t, n_heads):
    B, T, H = x_t.shape
    R = reg_t.shape[1]
    RT = R + T
    Fc = blk['wf2'].shape[0]
    q_tile = _pick_q_tile(T)
    has_skip = skip_t is not None

    flops = B * (8 * T * H * H + 4 * R * H * H + 4 * T * RT * H + 6 * T * H * Fc
                 + 8 * H * H)
    trans = B * (n_heads * T * RT + 2 * T * Fc + 4 * T)
    bytes_acc = (2 * B * T * H * (3 if has_skip else 2) + 2 * B * R * H + 4 * B * H
                 + 2 * (8 * H * H + 3 * H * Fc))

    in_specs = [pl.BlockSpec((1, T, H), lambda b, lens: (b, 0, 0))]
    args = [x_t]
    if has_skip:
        in_specs.append(pl.BlockSpec((1, T, H), lambda b, lens: (b, 0, 0)))
        args.append(skip_t)
    in_specs += [
        pl.BlockSpec((1, R, H), lambda b, lens: (b, 0, 0)),
        pl.BlockSpec((1, 1, H), lambda b, lens: (b, 0, 0)),
        _wspec(blk['n1_w'].shape), _wspec(blk['n1_b'].shape),
        _wspec(blk['nr_w'].shape), _wspec(blk['nr_b'].shape),
        _wspec(blk['wq'].shape), _wspec(blk['bq'].shape),
        _wspec(blk['wkv'].shape), _wspec(blk['bkv'].shape),
        _wspec(blk['wo'].shape), _wspec(blk['bo'].shape),
        _wspec(blk['n2_w'].shape), _wspec(blk['n2_b'].shape),
        _wspec(blk['wf1a'].shape), _wspec(blk['bf1a'].shape),
        _wspec(blk['wf1b'].shape), _wspec(blk['bf1b'].shape),
        _wspec(blk['wf2'].shape), _wspec(blk['bf2'].shape),
    ]
    args += [reg_t, temb3,
             blk['n1_w'], blk['n1_b'], blk['nr_w'], blk['nr_b'],
             blk['wq'], blk['bq'], blk['wkv'], blk['bkv'], blk['wo'], blk['bo'],
             blk['n2_w'], blk['n2_b'],
             blk['wf1a'], blk['bf1a'], blk['wf1b'], blk['bf1b'],
             blk['wf2'], blk['bf2']]

    grid_spec = pltpu.PrefetchScalarGridSpec(
        num_scalar_prefetch=1,
        grid=(B,),
        in_specs=in_specs,
        out_specs=pl.BlockSpec((1, T, H), lambda b, lens: (b, 0, 0)),
        scratch_shapes=[pltpu.VMEM((T, H), jnp.float32),    # q (pre-scaled)
                        pltpu.VMEM((T, H), jnp.float32)],   # residual stream x
    )
    return pl.pallas_call(
        functools.partial(_encoder_kernel, n_heads=n_heads, q_tile=q_tile,
                          has_skip=has_skip),
        out_shape=jax.ShapeDtypeStruct((B, T, H), jnp.bfloat16),
        grid_spec=grid_spec,
        compiler_params=pltpu.CompilerParams(
            dimension_semantics=("parallel",), vmem_limit_bytes=_vmem_limit()),
        cost_estimate=pl.CostEstimate(flops=int(flops),
                                      transcendentals=int(trans),
                                      bytes_accessed=int(bytes_acc)),
    )(lens, *args)


def _run_final(p, lens, x_t):
    B, T, H = x_t.shape
    OP = p['proj_w'].shape[-1]
    flops = 2 * B * T * H * OP
    bytes_acc = 2 * B * T * H + 4 * B * T * OP + 2 * H * OP
    grid_spec = pltpu.PrefetchScalarGridSpec(
        num_scalar_prefetch=1,
        grid=(B,),
        in_specs=[
            pl.BlockSpec((1, T, H), lambda b, lens: (b, 0, 0)),
            _wspec(p['final_g'].shape), _wspec(p['proj_w'].shape), _wspec(p['proj_b'].shape),
        ],
        out_specs=pl.BlockSpec((1, T, OP), lambda b, lens: (b, 0, 0)),
    )
    return pl.pallas_call(
        _final_kernel,
        out_shape=jax.ShapeDtypeStruct((B, T, OP), jnp.float32),
        grid_spec=grid_spec,
        compiler_params=pltpu.CompilerParams(
            dimension_semantics=("parallel",), vmem_limit_bytes=_vmem_limit()),
        cost_estimate=pl.CostEstimate(flops=int(flops), transcendentals=0,
                                      bytes_accessed=int(bytes_acc)),
    )(lens, x_t, p['final_g'], p['proj_w'], p['proj_b'])


# ----------------------------------------------------------------------------
# Full DiT forward
# ----------------------------------------------------------------------------
def dit_forward(params, x, mask, mu, t, aux, cond, cond_mask, *, n_heads):
    """x: (B, Cx, T), mask: (B, 1, T) prefix mask, mu: (B, Cmu, T),
    t: scalar or (B,), cond: (B, H, R), cond_mask: (B, 1, R).
    aux / cond_mask are unused by the reference forward."""
    del aux, cond_mask
    B = x.shape[0]

    t = jnp.asarray(t, jnp.float32).reshape(-1)
    t = jnp.broadcast_to(t, (B,))

    # --- timestep embedding (tiny glue, plain JAX) ---
    freqs = t[:, None] * params['fourier_w'][None, :] * 2.0 * jnp.pi
    emb = jnp.concatenate([t[:, None], jnp.sin(freqs), jnp.cos(freqs)], axis=-1)
    h = _silu(emb @ params['t_lin1_w'] + params['t_lin1_b'])
    temb = h @ params['t_lin2_w'] + params['t_lin2_b']        # (B, H)
    temb3 = temb[:, None, :]                                  # (B, 1, H) f32

    # prefix mask -> lengths, scalar-prefetched; masks rebuilt in-kernel
    lens = jnp.sum(mask.astype(jnp.int32), axis=(1, 2)).astype(jnp.int32)

    # --- transpose NCT -> NTC (glue) ---
    xin_t = jnp.transpose(jnp.concatenate([x, mu], axis=1), (0, 2, 1))   # (B,T,Cin)
    # registers = registers_param + cond (layer-invariant, hoisted), bf16 resident
    reg_t = (params['registers'][None, :, :]
             + jnp.transpose(cond, (0, 2, 1))).astype(jnp.bfloat16)      # (B,R,H)

    # --- prenet ResnetBlock1D (Pallas) ---
    h_t = _run_prenet(params, lens, xin_t, temb3)                        # (B,T,H) bf16

    # --- DiT encoder blocks (Pallas) with reference skip wiring ---
    n_layers = len(params['blocks'])
    skips = []
    for idx, blk in enumerate(params['blocks']):
        # TODO(synk): the per-layer TransformerBlock on `mu` and the CrossCondition
        # mixer are omitted: their 1x1 convs are zero-initialized in the reference
        # module, so at init they are exact identities on the x path.
        skip_t = None
        if idx < n_layers // 2:
            skips.append(h_t)
        else:
            skip_t = skips.pop()               # added inside the kernel (fused)
        h_t = _run_encoder_block(blk, lens, h_t, reg_t, temb3, skip_t, n_heads)

    # --- final RMSNorm + lane-padded 1x1 projection (Pallas) ---
    out_t = _run_final(params, lens, h_t)                                # (B,T,128)
    O = params['out_channels']
    return jnp.transpose(out_t[:, :, :O], (0, 2, 1))                     # (B,O,T)


# ----------------------------------------------------------------------------
# deterministic parameter initialization (synthetic weights, no checkpoint)
# ----------------------------------------------------------------------------
def init_params(key, in_channels, H, Fc, out_channels, num_registers, n_heads,
                n_layers=2):
    assert H % n_heads == 0, "hidden_channels must be divisible by n_heads"
    bf = jnp.bfloat16
    keys = iter(jax.random.split(key, 512))

    def nrm(shape, std=0.02, dtype=jnp.float32):
        return (jax.random.normal(next(keys), shape, jnp.float32) * std).astype(dtype)

    p = {'out_channels': out_channels}
    # TimestepEmbedding (plain JAX glue) - f32
    p['fourier_w'] = jax.random.normal(next(keys), (H // 2,), jnp.float32)
    p['t_lin1_w'] = nrm((H + 1, Fc)); p['t_lin1_b'] = nrm((Fc,), 0.01)
    p['t_lin2_w'] = nrm((Fc, H));     p['t_lin2_b'] = nrm((H,), 0.01)
    # prenet ResnetBlock1D: matmul weights bf16, biases/gains f32
    p['conv1_w'] = nrm((3, in_channels, H), dtype=bf); p['conv1_b'] = nrm((1, H), 0.01)
    p['norm1_g'] = jnp.ones((1, H), jnp.float32)
    p['conv2_w'] = nrm((3, H, H), dtype=bf);           p['conv2_b'] = nrm((1, H), 0.01)
    p['norm2_g'] = jnp.ones((1, H), jnp.float32)
    p['mlp_w'] = nrm((H, H), dtype=bf);                p['mlp_b'] = nrm((1, H), 0.01)
    p['res_w'] = nrm((in_channels, H), dtype=bf);      p['res_b'] = nrm((1, H), 0.01)
    # registers parameter, stored time-major (R, H)
    p['registers'] = nrm((num_registers, H))
    # encoder blocks
    p['blocks'] = []
    for _ in range(n_layers):
        blk = {
            'n1_w': nrm((H, H), dtype=bf), 'n1_b': nrm((1, H), 0.01),
            'nr_w': nrm((H, H), dtype=bf), 'nr_b': nrm((1, H), 0.01),
            'wq': nrm((H, H), dtype=bf), 'bq': nrm((1, H), 0.01),
            # fused K/V projection (H -> 2H)
            'wkv': nrm((H, 2 * H), dtype=bf), 'bkv': nrm((1, 2 * H), 0.01),
            # full-H output projection (heads merged on the lane axis)
            'wo': nrm((H, H), dtype=bf), 'bo': nrm((1, H), 0.01),
            'n2_w': nrm((H, H), dtype=bf), 'n2_b': nrm((1, H), 0.01),
            # SwiGLU FFN with split value/gate weights (lane-tile aligned)
            'wf1a': nrm((H, Fc), dtype=bf), 'bf1a': nrm((1, Fc), 0.01),
            'wf1b': nrm((H, Fc), dtype=bf), 'bf1b': nrm((1, Fc), 0.01),
            'wf2': nrm((Fc, H), dtype=bf), 'bf2': nrm((1, H), 0.01),
        }
        p['blocks'].append(blk)
    # final norm + lane-padded projection (zeros beyond out_channels)
    p['final_g'] = jnp.ones((1, H), jnp.float32)
    wp = jnp.zeros((H, OUT_PAD), jnp.float32).at[:, :out_channels].set(
        jax.random.normal(next(keys), (H, out_channels), jnp.float32) * 0.02)
    bp = jnp.zeros((1, OUT_PAD), jnp.float32).at[:, :out_channels].set(
        jax.random.normal(next(keys), (1, out_channels), jnp.float32) * 0.01)
    p['proj_w'] = wp.astype(bf)
    p['proj_b'] = bp
    return p


# ----------------------------------------------------------------------------
if __name__ == "__main__":
    B, Cx, Cmu, T = 2, 4, 4, 16
    H, Fc, O = 64, 128, 4
    n_heads, R = 4, 16
    n_layers = 2                     # even, matching the reference skip wiring
    in_channels = Cx + Cmu           # prenet sees cat([x, mu], dim=1)

    params = init_params(jax.random.PRNGKey(1234), in_channels, H, Fc, O, R,
                         n_heads, n_layers=n_layers)

    key = jax.random.PRNGKey(0)
    k1, k2, k3, k4 = jax.random.split(key, 4)
    x = jax.random.normal(k1, (B, Cx, T), jnp.float32)
    mu = jax.random.normal(k2, (B, Cmu, T), jnp.float32)
    lengths = jnp.array([T, T - 5])
    mask = (jnp.arange(T)[None, :] < lengths[:, None]).astype(jnp.float32)[:, None, :]
    t = jax.random.uniform(k3, (B,), jnp.float32)
    cond = jax.random.normal(k4, (B, H, R), jnp.float32)   # cond has hidden channels
    cond_mask = jnp.ones((B, 1, R), jnp.float32)
    aux = None  # unused by the reference forward

    out = dit_forward(params, x, mask, mu, t, aux, cond, cond_mask,
                      n_heads=n_heads)
    out = jax.block_until_ready(out)
    assert out.shape == (B, O, T), out.shape
    assert bool(jnp.all(jnp.isfinite(out)))
    print("KERNEL_OK")
</pallas_src>

<mosaic_0001>
module attributes {stable_mosaic.version = 11 : i64} {
  func.func @_k(%arg0: memref<16x128xf32, #tpu.memory_space<vmem>>, %arg1: memref<16x128xf32, #tpu.memory_space<vmem>>) attributes {dimension_semantics = [], scalar_prefetch = 0 : i64, scratch_operands = 0 : i64, tpu.core_type = #tpu.core_type<tc>} {
    %c0 = arith.constant 0 : index
    %c0_0 = arith.constant 0 : index
    %0 = vector.load %arg0[%c0, %c0_0] : memref<16x128xf32, #tpu.memory_space<vmem>>, vector<16x128xf32>
    %c1_i32 = arith.constant 1 : i32
    %1 = tpu.dynamic_rotate %0 by %c1_i32 dim 0 : vector<16x128xf32>, i32 -> vector<16x128xf32>
    %c0_1 = arith.constant 0 : index
    %c0_2 = arith.constant 0 : index
    %2 = vector.load %arg1[%c0_1, %c0_2] : memref<16x128xf32, #tpu.memory_space<vmem>>, vector<16x128xf32>
    tpu.vector_store %arg1[%c0_1, %c0_2], %1 {strides = array<i32>} : memref<16x128xf32, #tpu.memory_space<vmem>>, vector<16x128xf32>,
    return
  }
}

module attributes {stable_mosaic.version = 11 : i64} {
  func.func @_k(%arg0: i32, %arg1: memref<2xi32, #tpu.memory_space<smem>>, %arg2: memref<8x128xf32, #tpu.memory_space<vmem>>, %arg3: memref<8x128xf32, #tpu.memory_space<vmem>>, %arg4: memref<8x128xf32, #tpu.memory_space<vmem>>) attributes {dimension_semantics = [#tpu.dimension_semantics<arbitrary>], iteration_bounds = array<i64: 2>, scalar_prefetch = 1 : i64, scratch_operands = 0 : i64, tpu.core_type = #tpu.core_type<tc>, window_params = [{pipeline_mode = #tpu.pipeline_mode<synchronous>, transform_indices = @transform_0, window_bounds = array<i64: 8, 128>}, {pipeline_mode = #tpu.pipeline_mode<synchronous>, transform_indices = @transform_1, window_bounds = array<i64: 8, 128>}, {pipeline_mode = #tpu.pipeline_mode<synchronous>, transform_indices = @transform_2, window_bounds = array<i64: 8, 128>}]} {
    %c0 = arith.constant 0 : index
    %c0_0 = arith.constant 0 : index
    %0 = vector.load %arg2[%c0, %c0_0] : memref<8x128xf32, #tpu.memory_space<vmem>>, vector<8x128xf32>
    %c0_1 = arith.constant 0 : index
    %c0_2 = arith.constant 0 : index
    %1 = vector.load %arg3[%c0_1, %c0_2] : memref<8x128xf32, #tpu.memory_space<vmem>>, vector<8x128xf32>
    %2 = arith.addf %0, %1 : vector<8x128xf32>
    %c0_3 = arith.constant 0 : index
    %c0_4 = arith.constant 0 : index
    %3 = vector.load %arg4[%c0_3, %c0_4] : memref<8x128xf32, #tpu.memory_space<vmem>>, vector<8x128xf32>
    tpu.vector_store %arg4[%c0_3, %c0_4], %2 {strides = array<i32>} : memref<8x128xf32, #tpu.memory_space<vmem>>, vector<8x128xf32>,
    return
  }
  func.func @transform_0(%arg0: i32, %arg1: memref<2xi32, #tpu.memory_space<smem>>) -> (i32, i32) {
    %c0_i32 = arith.constant 0 : i32
    %c0_i32_0 = arith.constant 0 : i32
    %c0_i32_1 = arith.constant 0 : i32
    return %c0_i32, %c0_i32_0 : i32, i32
  }
  func.func @transform_1(%arg0: i32, %arg1: memref<2xi32, #tpu.memory_space<smem>>) -> (i32, i32) {
    %c0_i32 = arith.constant 0 : i32
    %c0_i32_0 = arith.constant 0 : i32
    %c0_i32_1 = arith.constant 0 : i32
    return %c0_i32, %c0_i32_0 : i32, i32
  }
  func.func @transform_2(%arg0: i32, %arg1: memref<2xi32, #tpu.memory_space<smem>>) -> (i32, i32) {
    %c0_i32 = arith.constant 0 : i32
    %c0_i32_0 = arith.constant 0 : i32
    %c0_i32_1 = arith.constant 0 : i32
    return %c0_i32, %c0_i32_0 : i32, i32
  }
}

module attributes {stable_mosaic.version = 11 : i64} {
  func.func @_prenet_kernel(%arg0: i32, %arg1: memref<2xi32, #tpu.memory_space<smem>>, %arg2: memref<1x16x8xf32, #tpu.memory_space<vmem>>, %arg3: memref<1x1x64xf32, #tpu.memory_space<vmem>>, %arg4: memref<3x8x64xbf16, #tpu.memory_space<vmem>>, %arg5: memref<1x64xf32, #tpu.memory_space<vmem>>, %arg6: memref<1x64xf32, #tpu.memory_space<vmem>>, %arg7: memref<3x64x64xbf16, #tpu.memory_space<vmem>>, %arg8: memref<1x64xf32, #tpu.memory_space<vmem>>, %arg9: memref<1x64xf32, #tpu.memory_space<vmem>>, %arg10: memref<64x64xbf16, #tpu.memory_space<vmem>>, %arg11: memref<1x64xf32, #tpu.memory_space<vmem>>, %arg12: memref<8x64xbf16, #tpu.memory_space<vmem>>, %arg13: memref<1x64xf32, #tpu.memory_space<vmem>>, %arg14: memref<1x16x64xbf16, #tpu.memory_space<vmem>>) attributes {dimension_semantics = [#tpu.dimension_semantics<parallel>], iteration_bounds = array<i64: 2>, scalar_prefetch = 1 : i64, scratch_operands = 0 : i64, tpu.core_type = #tpu.core_type<tc>, window_params = [{transform_indices = @transform_0, window_bounds = array<i64: 1, 16, 8>}, {transform_indices = @transform_1, window_bounds = array<i64: 1, 1, 64>}, {pipeline_mode = #tpu.pipeline_mode<synchronous>, transform_indices = @transform_2, window_bounds = array<i64: 3, 8, 64>}, {pipeline_mode = #tpu.pipeline_mode<synchronous>, transform_indices = @transform_3, window_bounds = array<i64: 1, 64>}, {pipeline_mode = #tpu.pipeline_mode<synchronous>, transform_indices = @transform_4, window_bounds = array<i64: 1, 64>}, {pipeline_mode = #tpu.pipeline_mode<synchronous>, transform_indices = @transform_5, window_bounds = array<i64: 3, 64, 64>}, {pipeline_mode = #tpu.pipeline_mode<synchronous>, transform_indices = @transform_6, window_bounds = array<i64: 1, 64>}, {pipeline_mode = #tpu.pipeline_mode<synchronous>, transform_indices = @transform_7, window_bounds = array<i64: 1, 64>}, {pipeline_mode = #tpu.pipeline_mode<synchronous>, transform_indices = @transform_8, window_bounds = array<i64: 64, 64>}, {pipeline_mode = #tpu.pipeline_mode<synchronous>, transform_indices = @transform_9, window_bounds = array<i64: 1, 64>}, {pipeline_mode = #tpu.pipeline_mode<synchronous>, transform_indices = @transform_10, window_bounds = array<i64: 8, 64>}, {pipeline_mode = #tpu.pipeline_mode<synchronous>, transform_indices = @transform_11, window_bounds = array<i64: 1, 64>}, {transform_indices = @transform_12, window_bounds = array<i64: 1, 16, 64>}]} {
    %c0 = arith.constant 0 : index
    %c0_0 = arith.constant 0 : index
    %c0_1 = arith.constant 0 : index
    %0 = vector.load %arg2[%c0, %c0_0, %c0_1] : memref<1x16x8xf32, #tpu.memory_space<vmem>>, vector<1x16x8xf32>
    %1 = vector.shape_cast %0 : vector<1x16x8xf32> to vector<16x8xf32>
    %c0_2 = arith.constant 0 : index
    %c0_3 = arith.constant 0 : index
    %c0_4 = arith.constant 0 : index
    %2 = vector.load %arg3[%c0_2, %c0_3, %c0_4] : memref<1x1x64xf32, #tpu.memory_space<vmem>>, vector<1x1x64xf32>
    %3 = vector.shape_cast %2 : vector<1x1x64xf32> to vector<1x64xf32>
    %4 = arith.index_cast %arg0 : i32 to index
    %5 = memref.load %arg1[%4] : memref<2xi32, #tpu.memory_space<smem>>
    %6 = tpu.iota {dimensions = array<i32: 0>} : vector<16x1xi32>
    %7 = vector.broadcast %5 : i32 to vector<16x1xi32>
    %8 = arith.cmpi slt, %6, %7 : vector<16x1xi32>
    %9 = arith.extui %8 : vector<16x1xi1> to vector<16x1xi32>
    %10 = arith.sitofp %9 : vector<16x1xi32> to vector<16x1xf32>
    %11 = vector.broadcast %10 : vector<16x1xf32> to vector<16x8xf32>
    %12 = arith.mulf %1, %11 : vector<16x8xf32>
    %cst = arith.constant 0.000000e+00 : f32
    %13 = vector.broadcast %cst : f32 to vector<1x8xf32>
    %14 = vector.extract_strided_slice %12 {offsets = [0, 0], sizes = [15, 8], strides = [1, 1]} : vector<16x8xf32> to vector<15x8xf32>
    %15 = tpu.concatenate %13, %14 in 0 : vector<1x8xf32>, vector<15x8xf32> -> vector<16x8xf32>
    %16 = vector.extract_strided_slice %12 {offsets = [1, 0], sizes = [15, 8], strides = [1, 1]} : vector<16x8xf32> to vector<15x8xf32>
    %17 = tpu.concatenate %16, %13 in 0 : vector<15x8xf32>, vector<1x8xf32> -> vector<16x8xf32>
    %c0_5 = arith.constant 0 : index
    %c0_6 = arith.constant 0 : index
    %c0_7 = arith.constant 0 : index
    %18 = vector.load %arg4[%c0_5, %c0_6, %c0_7] : memref<3x8x64xbf16, #tpu.memory_space<vmem>>, vector<1x8x64xbf16>
    %19 = vector.shape_cast %18 : vector<1x8x64xbf16> to vector<8x64xbf16>
    %20 = arith.truncf %15 : vector<16x8xf32> to vector<16x8xbf16>
    %cst_8 = arith.constant dense<0.000000e+00> : vector<16x64xf32>
    %21 = tpu.matmul %20, %19, %cst_8 {dimension_numbers = #tpu.dot_dimension_numbers<[1], [0], [0], [1], [0, 0, 1, 1], [], []>} : vector<16x8xbf16>, vector<8x64xbf16>, vector<16x64xf32> -> vector<16x64xf32>
    %c1 = arith.constant 1 : index
    %c0_9 = arith.constant 0 : index
    %c0_10 = arith.constant 0 : index
    %22 = vector.load %arg4[%c1, %c0_9, %c0_10] : memref<3x8x64xbf16, #tpu.memory_space<vmem>>, vector<1x8x64xbf16>
    %23 = vector.shape_cast %22 : vector<1x8x64xbf16> to vector<8x64xbf16>
    %24 = arith.truncf %12 : vector<16x8xf32> to vector<16x8xbf16>
    %cst_11 = arith.constant dense<0.000000e+00> : vector<16x64xf32>
    %25 = tpu.matmul %24, %23, %cst_11 {dimension_numbers = #tpu.dot_dimension_numbers<[1], [0], [0], [1], [0, 0, 1, 1], [], []>} : vector<16x8xbf16>, vector<8x64xbf16>, vector<16x64xf32> -> vector<16x64xf32>
    %26 = arith.addf %21, %25 : vector<16x64xf32>
    %c2 = arith.constant 2 : index
    %c0_12 = arith.constant 0 : index
    %c0_13 = arith.constant 0 : index
    %27 = vector.load %arg4[%c2, %c0_12, %c0_13] : memref<3x8x64xbf16, #tpu.memory_space<vmem>>, vector<1x8x64xbf16>
    %28 = vector.shape_cast %27 : vector<1x8x64xbf16> to vector<8x64xbf16>
    %29 = arith.truncf %17 : vector<16x8xf32> to vector<16x8xbf16>
    %cst_14 = arith.constant dense<0.000000e+00> : vector<16x64xf32>
    %30 = tpu.matmul %29, %28, %cst_14 {dimension_numbers = #tpu.dot_dimension_numbers<[1], [0], [0], [1], [0, 0, 1, 1], [], []>} : vector<16x8xbf16>, vector<8x64xbf16>, vector<16x64xf32> -> vector<16x64xf32>
    %31 = arith.addf %26, %30 : vector<16x64xf32>
    %c0_15 = arith.constant 0 : index
    %c0_16 = arith.constant 0 : index
    %32 = vector.load %arg5[%c0_15, %c0_16] : memref<1x64xf32, #tpu.memory_space<vmem>>, vector<1x64xf32>
    %33 = vector.broadcast %32 : vector<1x64xf32> to vector<16x64xf32>
    %34 = arith.addf %31, %33 : vector<16x64xf32>
    %35 = arith.mulf %34, %34 : vector<16x64xf32>
    %cst_17 = arith.constant dense<0.000000e+00> : vector<16xf32>
    %36 = vector.multi_reduction <add>, %35, %cst_17 [1] : vector<16x64xf32> to vector<16xf32>
    %37 = vector.shape_cast %36 : vector<16xf32> to vector<16x1xf32>
    %cst_18 = arith.constant 6.400000e+01 : f32
    %38 = vector.broadcast %cst_18 : f32 to vector<16x1xf32>
    %39 = arith.divf %37, %38 : vector<16x1xf32>
    %cst_19 = arith.constant 9.99999997E-7 : f32
    %40 = vector.broadcast %cst_19 : f32 to vector<16x1xf32>
    %41 = arith.addf %39, %40 : vector<16x1xf32>
    %42 = math.rsqrt %41 : vector<16x1xf32>
    %43 = vector.broadcast %42 : vector<16x1xf32> to vector<16x64xf32>
    %44 = arith.mulf %34, %43 : vector<16x64xf32>
    %c0_20 = arith.constant 0 : index
    %c0_21 = arith.constant 0 : index
    %45 = vector.load %arg6[%c0_20, %c0_21] : memref<1x64xf32, #tpu.memory_space<vmem>>, vector<1x64xf32>
    %46 = vector.broadcast %45 : vector<1x64xf32> to vector<16x64xf32>
    %47 = arith.mulf %44, %46 : vector<16x64xf32>
    %48 = arith.negf %47 : vector<16x64xf32>
    %49 = math.exp %48 : vector<16x64xf32>
    %cst_22 = arith.constant 1.000000e+00 : f32
    %50 = vector.broadcast %cst_22 : f32 to vector<16x64xf32>
    %51 = arith.addf %50, %49 : vector<16x64xf32>
    %52 = arith.divf %50, %51 : vector<16x64xf32>
    %53 = arith.mulf %47, %52 : vector<16x64xf32>
    %54 = vector.broadcast %10 : vector<16x1xf32> to vector<16x64xf32>
    %55 = arith.mulf %53, %54 : vector<16x64xf32>
    %56 = arith.negf %3 : vector<1x64xf32>
    %57 = math.exp %56 : vector<1x64xf32>
    %cst_23 = arith.constant 1.000000e+00 : f32
    %58 = vector.broadcast %cst_23 : f32 to vector<1x64xf32>
    %59 = arith.addf %58, %57 : vector<1x64xf32>
    %60 = arith.divf %58, %59 : vector<1x64xf32>
    %61 = arith.mulf %3, %60 : vector<1x64xf32>
    %c0_24 = arith.constant 0 : index
    %c0_25 = arith.constant 0 : index
    %62 = vector.load %arg10[%c0_24, %c0_25] : memref<64x64xbf16, #tpu.memory_space<vmem>>, vector<64x64xbf16>
    %63 = arith.truncf %61 : vector<1x64xf32> to vector<1x64xbf16>
    %cst_26 = arith.constant dense<0.000000e+00> : vector<1x64xf32>
    %64 = tpu.matmul %63, %62, %cst_26 {dimension_numbers = #tpu.dot_dimension_numbers<[1], [0], [0], [1], [0, 0, 1, 1], [], []>} : vector<1x64xbf16>, vector<64x64xbf16>, vector<1x64xf32> -> vector<1x64xf32>
    %c0_27 = arith.constant 0 : index
    %c0_28 = arith.constant 0 : index
    %65 = vector.load %arg11[%c0_27, %c0_28] : memref<1x64xf32, #tpu.memory_space<vmem>>, vector<1x64xf32>
    %66 = arith.addf %64, %65 : vector<1x64xf32>
    %67 = vector.broadcast %66 : vector<1x64xf32> to vector<16x64xf32>
    %68 = arith.addf %55, %67 : vector<16x64xf32>
    %69 = vector.broadcast %10 : vector<16x1xf32> to vector<16x64xf32>
    %70 = arith.mulf %68, %69 : vector<16x64xf32>
    %cst_29 = arith.constant 0.000000e+00 : f32
    %71 = vector.broadcast %cst_29 : f32 to vector<1x64xf32>
    %72 = vector.extract_strided_slice %70 {offsets = [0, 0], sizes = [15, 64], strides = [1, 1]} : vector<16x64xf32> to vector<15x64xf32>
    %73 = tpu.concatenate %71, %72 in 0 : vector<1x64xf32>, vector<15x64xf32> -> vector<16x64xf32>
    %74 = vector.extract_strided_slice %70 {offsets = [1, 0], sizes = [15, 64], strides = [1, 1]} : vector<16x64xf32> to vector<15x64xf32>
    %75 = tpu.concatenate %74, %71 in 0 : vector<15x64xf32>, vector<1x64xf32> -> vector<16x64xf32>
    %c0_30 = arith.constant 0 : index
    %c0_31 = arith.constant 0 : index
    %c0_32 = arith.constant 0 : index
    %76 = vector.load %arg7[%c0_30, %c0_31, %c0_32] : memref<3x64x64xbf16, #tpu.memory_space<vmem>>, vector<1x64x64xbf16>
    %77 = vector.shape_cast %76 : vector<1x64x64xbf16> to vector<64x64xbf16>
    %78 = arith.truncf %73 : vector<16x64xf32> to vector<16x64xbf16>
    %cst_33 = arith.constant dense<0.000000e+00> : vector<16x64xf32>
    %79 = tpu.matmul %78, %77, %cst_33 {dimension_numbers = #tpu.dot_dimension_numbers<[1], [0], [0], [1], [0, 0, 1, 1], [], []>} : vector<16x64xbf16>, vector<64x64xbf16>, vector<16x64xf32> -> vector<16x64xf32>
    %c1_34 = arith.constant 1 : index
    %c0_35 = arith.constant 0 : index
    %c0_36 = arith.constant 0 : index
    %80 = vector.load %arg7[%c1_34, %c0_35, %c0_36] : memref<3x64x64xbf16, #tpu.memory_space<vmem>>, vector<1x64x64xbf16>
    %81 = vector.shape_cast %80 : vector<1x64x64xbf16> to vector<64x64xbf16>
    %82 = arith.truncf %70 : vector<16x64xf32> to vector<16x64xbf16>
    %cst_37 = arith.constant dense<0.000000e+00> : vector<16x64xf32>
    %83 = tpu.matmul %82, %81, %cst_37 {dimension_numbers = #tpu.dot_dimension_numbers<[1], [0], [0], [1], [0, 0, 1, 1], [], []>} : vector<16x64xbf16>, vector<64x64xbf16>, vector<16x64xf32> -> vector<16x64xf32>
    %84 = arith.addf %79, %83 : vector<16x64xf32>
    %c2_38 = arith.constant 2 : index
    %c0_39 = arith.constant 0 : index
    %c0_40 = arith.constant 0 : index
    %85 = vector.load %arg7[%c2_38, %c0_39, %c0_40] : memref<3x64x64xbf16, #tpu.memory_space<vmem>>, vector<1x64x64xbf16>
    %86 = vector.shape_cast %85 : vector<1x64x64xbf16> to vector<64x64xbf16>
    %87 = arith.truncf %75 : vector<16x64xf32> to vector<16x64xbf16>
    %cst_41 = arith.constant dense<0.000000e+00> : vector<16x64xf32>
    %88 = tpu.matmul %87, %86, %cst_41 {dimension_numbers = #tpu.dot_dimension_numbers<[1], [0], [0], [1], [0, 0, 1, 1], [], []>} : vector<16x64xbf16>, vector<64x64xbf16>, vector<16x64xf32> -> vector<16x64xf32>
    %89 = arith.addf %84, %88 : vector<16x64xf32>
    %c0_42 = arith.constant 0 : index
    %c0_43 = arith.constant 0 : index
    %90 = vector.load %arg8[%c0_42, %c0_43] : memref<1x64xf32, #tpu.memory_space<vmem>>, vector<1x64xf32>
    %91 = vector.broadcast %90 : vector<1x64xf32> to vector<16x64xf32>
    %92 = arith.addf %89, %91 : vector<16x64xf32>
    %93 = arith.mulf %92, %92 : vector<16x64xf32>
    %cst_44 = arith.constant dense<0.000000e+00> : vector<16xf32>
    %94 = vector.multi_reduction <add>, %93, %cst_44 [1] : vector<16x64xf32> to vector<16xf32>
    %95 = vector.shape_cast %94 : vector<16xf32> to vector<16x1xf32>
    %cst_45 = arith.constant 6.400000e+01 : f32
    %96 = vector.broadcast %cst_45 : f32 to vector<16x1xf32>
    %97 = arith.divf %95, %96 : vector<16x1xf32>
    %cst_46 = arith.constant 9.99999997E-7 : f32
    %98 = vector.broadcast %cst_46 : f32 to vector<16x1xf32>
    %99 = arith.addf %97, %98 : vector<16x1xf32>
    %100 = math.rsqrt %99 : vector<16x1xf32>
    %101 = vector.broadcast %100 : vector<16x1xf32> to vector<16x64xf32>
    %102 = arith.mulf %92, %101 : vector<16x64xf32>
    %c0_47 = arith.constant 0 : index
    %c0_48 = arith.constant 0 : index
    %103 = vector.load %arg9[%c0_47, %c0_48] : memref<1x64xf32, #tpu.memory_space<vmem>>, vector<1x64xf32>
    %104 = vector.broadcast %103 : vector<1x64xf32> to vector<16x64xf32>
    %105 = arith.mulf %102, %104 : vector<16x64xf32>
    %106 = arith.negf %105 : vector<16x64xf32>
    %107 = math.exp %106 : vector<16x64xf32>
    %cst_49 = arith.constant 1.000000e+00 : f32
    %108 = vector.broadcast %cst_49 : f32 to vector<16x64xf32>
    %109 = arith.addf %108, %107 : vector<16x64xf32>
    %110 = arith.divf %108, %109 : vector<16x64xf32>
    %111 = arith.mulf %105, %110 : vector<16x64xf32>
    %112 = vector.broadcast %10 : vector<16x1xf32> to vector<16x64xf32>
    %113 = arith.mulf %111, %112 : vector<16x64xf32>
    %c0_50 = arith.constant 0 : index
    %c0_51 = arith.constant 0 : index
    %114 = vector.load %arg12[%c0_50, %c0_51] : memref<8x64xbf16, #tpu.memory_space<vmem>>, vector<8x64xbf16>
    %115 = arith.truncf %12 : vector<16x8xf32> to vector<16x8xbf16>
    %cst_52 = arith.constant dense<0.000000e+00> : vector<16x64xf32>
    %116 = tpu.matmul %115, %114, %cst_52 {dimension_numbers = #tpu.dot_dimension_numbers<[1], [0], [0], [1], [0, 0, 1, 1], [], []>} : vector<16x8xbf16>, vector<8x64xbf16>, vector<16x64xf32> -> vector<16x64xf32>
    %c0_53 = arith.constant 0 : index
    %c0_54 = arith.constant 0 : index
    %117 = vector.load %arg13[%c0_53, %c0_54] : memref<1x64xf32, #tpu.memory_space<vmem>>, vector<1x64xf32>
    %118 = vector.broadcast %117 : vector<1x64xf32> to vector<16x64xf32>
    %119 = arith.addf %116, %118 : vector<16x64xf32>
    %120 = arith.addf %113, %119 : vector<16x64xf32>
    %121 = arith.truncf %120 : vector<16x64xf32> to vector<16x64xbf16>
    %c0_55 = arith.constant 0 : index
    %c0_56 = arith.constant 0 : index
    %c0_57 = arith.constant 0 : index
    %122 = vector.load %arg14[%c0_55, %c0_56, %c0_57] : memref<1x16x64xbf16, #tpu.memory_space<vmem>>, vector<1x16x64xbf16>
    %123 = vector.shape_cast %122 : vector<1x16x64xbf16> to vector<16x64xbf16>
    %124 = vector.shape_cast %121 : vector<16x64xbf16> to vector<1x16x64xbf16>
    tpu.vector_store %arg14[%c0_55, %c0_56, %c0_57], %124 {strides = array<i32>} : memref<1x16x64xbf16, #tpu.memory_space<vmem>>, vector<1x16x64xbf16>,
    return
  }
  func.func @transform_0(%arg0: i32, %arg1: memref<2xi32, #tpu.memory_space<smem>>) -> (i32, i32, i32) {
    %c0_i32 = arith.constant 0 : i32
    %c0_i32_0 = arith.constant 0 : i32
    %c0_i32_1 = arith.constant 0 : i32
    return %arg0, %c0_i32, %c0_i32_0 : i32, i32, i32
  }
  func.func @transform_1(%arg0: i32, %arg1: memref<2xi32, #tpu.memory_space<smem>>) -> (i32, i32, i32) {
    %c0_i32 = arith.constant 0 : i32
    %c0_i32_0 = arith.constant 0 : i32
    %c0_i32_1 = arith.constant 0 : i32
    return %arg0, %c0_i32, %c0_i32_0 : i32, i32, i32
  }
  func.func @transform_2(%arg0: i32, %arg1: memref<2xi32, #tpu.memory_space<smem>>) -> (i32, i32, i32) {
    %c0_i32 = arith.constant 0 : i32
    %c0_i32_0 = arith.constant 0 : i32
    %c0_i32_1 = arith.constant 0 : i32
    %c0_i32_2 = arith.constant 0 : i32
    return %c0_i32, %c0_i32_0, %c0_i32_1 : i32, i32, i32
  }
  func.func @transform_3(%arg0: i32, %arg1: memref<2xi32, #tpu.memory_space<smem>>) -> (i32, i32) {
    %c0_i32 = arith.constant 0 : i32
    %c0_i32_0 = arith.constant 0 : i32
    %c0_i32_1 = arith.constant 0 : i32
    return %c0_i32, %c0_i32_0 : i32, i32
  }
  func.func @transform_4(%arg0: i32, %arg1: memref<2xi32, #tpu.memory_space<smem>>) -> (i32, i32) {
    %c0_i32 = arith.constant 0 : i32
    %c0_i32_0 = arith.constant 0 : i32
    %c0_i32_1 = arith.constant 0 : i32
    return %c0_i32, %c0_i32_0 : i32, i32
  }
  func.func @transform_5(%arg0: i32, %arg1: memref<2xi32, #tpu.memory_space<smem>>) -> (i32, i32, i32) {
    %c0_i32 = arith.constant 0 : i32
    %c0_i32_0 = arith.constant 0 : i32
    %c0_i32_1 = arith.constant 0 : i32
    %c0_i32_2 = arith.constant 0 : i32
    return %c0_i32, %c0_i32_0, %c0_i32_1 : i32, i32, i32
  }
  func.func @transform_6(%arg0: i32, %arg1: memref<2xi32, #tpu.memory_space<smem>>) -> (i32, i32) {
    %c0_i32 = arith.constant 0 : i32
    %c0_i32_0 = arith.constant 0 : i32
    %c0_i32_1 = arith.constant 0 : i32
    return %c0_i32, %c0_i32_0 : i32, i32
  }
  func.func @transform_7(%arg0: i32, %arg1: memref<2xi32, #tpu.memory_space<smem>>) -> (i32, i32) {
    %c0_i32 = arith.constant 0 : i32
    %c0_i32_0 = arith.constant 0 : i32
    %c0_i32_1 = arith.constant 0 : i32
    return %c0_i32, %c0_i32_0 : i32, i32
  }
  func.func @transform_8(%arg0: i32, %arg1: memref<2xi32, #tpu.memory_space<smem>>) -> (i32, i32) {
    %c0_i32 = arith.constant 0 : i32
    %c0_i32_0 = arith.constant 0 : i32
    %c0_i32_1 = arith.constant 0 : i32
    return %c0_i32, %c0_i32_0 : i32, i32
  }
  func.func @transform_9(%arg0: i32, %arg1: memref<2xi32, #tpu.memory_space<smem>>) -> (i32, i32) {
    %c0_i32 = arith.constant 0 : i32
    %c0_i32_0 = arith.constant 0 : i32
    %c0_i32_1 = arith.constant 0 : i32
    return %c0_i32, %c0_i32_0 : i32, i32
  }
  func.func @transform_10(%arg0: i32, %arg1: memref<2xi32, #tpu.memory_space<smem>>) -> (i32, i32) {
    %c0_i32 = arith.constant 0 : i32
    %c0_i32_0 = arith.constant 0 : i32
    %c0_i32_1 = arith.constant 0 : i32
    return %c0_i32, %c0_i32_0 : i32, i32
  }
  func.func @transform_11(%arg0: i32, %arg1: memref<2xi32, #tpu.memory_space<smem>>) -> (i32, i32) {
    %c0_i32 = arith.constant 0 : i32
    %c0_i32_0 = arith.constant 0 : i32
    %c0_i32_1 = arith.constant 0 : i32
    return %c0_i32, %c0_i32_0 : i32, i32
  }
  func.func @transform_12(%arg0: i32, %arg1: memref<2xi32, #tpu.memory_space<smem>>) -> (i32, i32, i32) {
    %c0_i32 = arith.constant 0 : i32
    %c0_i32_0 = arith.constant 0 : i32
    %c0_i32_1 = arith.constant 0 : i32
    return %arg0, %c0_i32, %c0_i32_0 : i32, i32, i32
  }
}

</mosaic_0001>

<llo_original>
// kernel: tpu_custom_call.1
$region0: #{tpu_custom_call.1}
  #allocation0 [shape = 'u32[]', space=smem, size = 0x4, offset = 0x4, fixed_abs, tag = 'smem constant byte address 0x4 - core index']
  #allocation1 [shape = 'u32[144,128]{1,0:T(1,128)}', space=vmem, size = 0x12000, scoped, tag = 'internal scratch']
  %s0 = inlined_call_operand.hbm [shape: f32[16,128], index: 0, kind: input, shape index: {}]
  %s1 = inlined_call_operand.hbm [shape: f32[16,128], index: 1, kind: output, shape index: {}]
  %s2 = sld [smem:[#allocation0]]
  $region18: #{tpu_custom_call.1} parent=0
    _
  %s4 = ssub.s32 1, %s2
  %s5 = scalar_select 0, %s4, %s2
  $region1: #{tpu_custom_call.1} parent=0
    #allocation2 [shape = 'u8[8192]{0}', space=vmem, size = 0x2000, scoped, tag = 'input window, operand 0, single buffered']
    #allocation3 [shape = 's32[1]{0}', space=sflag, size = 0x4, scoped, tag = 'scoped memory for tpu_custom_call.1']
    #allocation4 [shape = 's32[1]{0}', space=sflag, size = 0x4, scoped, tag = 'scoped memory for tpu_custom_call.1']
    #allocation5 [shape = 'u8[8192]{0}', space=vmem, size = 0x2000, scoped, tag = 'output window, operand 0, single buffered']
    %6 = vsyncpa [#allocation3], 0
    %7 = vsyncpa [#allocation4], 0
    // Predicated region
    $region2: #{tpu_custom_call.1} parent=1 // pred_check
      _
    $region3: #{tpu_custom_call.1} parent=1 // pred_check_branch
      %9 = sbr.rel (0) target = $region5
    $region4: #{tpu_custom_call.1} parent=1 // pred_region
      %s11 = ssub.s32 256, 256
      %12 = vsyncadd [#allocation3], %s11
      %s13 = sshll.u32 [#allocation2], 4
      %s14 = int_to_ptr.vmem [resolvable:$true] %s13
      %19 = dma.hbm_to_vmem [thread:$0]  %s0, 256, %s14, [#allocation3], 128, 128, 8
    $region5: #{tpu_custom_call.1} parent=1 // pred_fallthru
      _
    // Predicated region
    $region6: #{tpu_custom_call.1} parent=1 // pred_check
      _
    $region7: #{tpu_custom_call.1} parent=1 // pred_check_branch
      %21 = sbr.rel (0) target = $region9
    $region8: #{tpu_custom_call.1} parent=1 // pred_region
      %22 = dma.done [#allocation3], 256
    $region9: #{tpu_custom_call.1} parent=1 // pred_fallthru
      _
    %v23 = vld [vmem:[#allocation2] sm:$0xff]
    %v24 = vld [vmem:[#allocation2 + $0x8] sm:$0xff]
    %v25 = vrot.slane %v23, 7
    %v26 = vrot.slane %v24, 7
    %v27 = vlaneseq
    %v28 = vshrl.u32 %v27, 7
    %vm29 = vcmp.lt.s32.totalorder %v28, 1
    %v30 = vsel %vm29, %v25, %v26
    %v31 = vsel %vm29, %v26, %v25
    %32 = vst [vmem:[#allocation5] sm:$0xff] %v31
    %33 = vst [vmem:[#allocation5 + $0x8] sm:$0xff] %v30
    // Predicated region
    $region10: #{tpu_custom_call.1} parent=1 // pred_check
      _
    $region11: #{tpu_custom_call.1} parent=1 // pred_check_branch
      %35 = sbr.rel (0) target = $region13
    $region12: #{tpu_custom_call.1} parent=1 // pred_region
      %s37 = ssub.s32 256, 256
      %38 = vsyncadd [#allocation4], %s37
      %s39 = sshll.u32 [#allocation5], 4
      %s40 = int_to_ptr.vmem [resolvable:$true] %s39
      %45 = dma.vmem_to_hbm [thread:$0]  %s40, 256, %s1, [#allocation4], 128, 128, 8
    $region13: #{tpu_custom_call.1} parent=1 // pred_fallthru
      _
    // Predicated region
    $region14: #{tpu_custom_call.1} parent=1 // pred_check
      _
    $region15: #{tpu_custom_call.1} parent=1 // pred_check_branch
      %47 = sbr.rel (0) target = $region17
    $region16: #{tpu_custom_call.1} parent=1 // pred_region
      %48 = dma.done [#allocation4], 256
    $region17: #{tpu_custom_call.1} parent=1 // pred_fallthru
      _
    %49 = vsyncpa [#allocation3], 1
    %50 = vsyncpa [#allocation4], 1

// kernel: tpu_custom_call.1
$region0: #{tpu_custom_call.1}
  #allocation0 [shape = 'u32[]', space=smem, size = 0x4, offset = 0x4, fixed_abs, tag = 'smem constant byte address 0x4 - core index']
  #allocation1 [shape = 'u32[144,128]{1,0:T(1,128)}', space=vmem, size = 0x12000, scoped, tag = 'internal scratch']
  #allocation2 [shape = 's32[1]{0}', space=sflag, size = 0x4, scoped, tag = 'scoped memory for tpu_custom_call.1']
  #allocation3 [shape = 'u8[512]{0}', space=smem, size = 0x200, scoped, tag = 'prefetched SMEM operand 0']
  %s0 = inlined_call_operand.hbm [shape: s32[2], index: 0, kind: input, shape index: {}]
  %s1 = inlined_call_operand.hbm [shape: f32[8,128], index: 1, kind: input, shape index: {}]
  %s2 = inlined_call_operand.hbm [shape: f32[8,128], index: 2, kind: input, shape index: {}]
  %s3 = inlined_call_operand.hbm [shape: f32[8,128], index: 3, kind: output, shape index: {}]
  %s4 = sld [smem:[#allocation0]]
  $region49: #{tpu_custom_call.1} parent=0
    _
  %s6 = ssub.s32 1, %s4
  %s7 = scalar_select 0, %s6, %s4
  %9 = dma.hbm_to_smem %s0, 16, [#allocation3], [#allocation2]
  %10 = dma.done [#allocation2], 16
  %11 = sfence
  $region1: #{tpu_custom_call.1} parent=0
    #allocation4 [shape = 'u8[4096]{0}', space=vmem, size = 0x1000, scoped, tag = 'input window, operand 1, single buffered']
    #allocation5 [shape = 's32[2]{0}', space=sflag, size = 0x8, scoped, tag = 'scoped memory for tpu_custom_call.1']
    #allocation6 [shape = 's32[2]{0}', space=sflag, size = 0x8, scoped, tag = 'scoped memory for tpu_custom_call.1']
    #allocation7 [shape = 'u8[4096]{0}', space=vmem, size = 0x1000, scoped, tag = 'input window, operand 2, single buffered']
    #allocation8 [shape = 's32[1]{0}', space=sflag, size = 0x4, scoped, tag = 'scoped memory for tpu_custom_call.1']
    #allocation9 [shape = 'u8[4096]{0}', space=vmem, size = 0x1000, scoped, tag = 'output window, operand 0, single buffered']
    %12 = vsyncpa [#allocation5], 0
    %13 = vsyncpa [#allocation8], 0
    %14 = vsyncpa [#allocation6], 0
    loop: start=0, step=1, limit=4
    $region2: #{tpu_custom_call.1} parent=1 // loop_pre_header
      _
    $region3: #{tpu_custom_call.1} parent=1 // loop_header
      %s16 = sphi 0, %s20
      %p17 = scmp.ge.s32.totalorder %s16, 4
      %s24 = sphi 0, %s24
      %s26 = sphi 0, %s24
      %s27 = sphi 0, %s26
      %s41 = sphi 0, %s27
      %s45 = sphi 0, %s45
      %s47 = sphi 0, %s45
      %s48 = sphi 0, %s47
      %s62 = sphi 0, %s48
      %s66 = sphi 0, %s66
      %s68 = sphi 0, %s66
      %s69 = sphi 0, %s68
      %s83 = sphi 0, %s69
    $region4: #{tpu_custom_call.1} parent=1 // loop_header_branch
      %19 = sbr.rel (%p17) target = $region8
    $region5: #{tpu_custom_call.1} parent=1 // loop_body
      %s21 = ssub.s32 %s16, 1
      %s22 = ssub.s32 %s16, 2
      %s23 = sadd.s32 %s16, 1
      %s25 = sadd.s32 %s24, 1
      %p28 = scmp.eq.s32.totalorder %s16, 1
      %p29 = scmp.ne.s32.totalorder %s24, %s26
      %p30 = scmp.eq.s32.totalorder %s16, 0
      %p31 = por %p29, %p30
      %p32 = scmp.ne.s32.totalorder %s24, %s26
      %p33 = scmp.eq.s32.totalorder %s21, 1
      %p34 = por %p32, %p33
      %p35 = scmp.ne.s32.totalorder %s26, %s27
      %p36 = scmp.eq.s32.totalorder %s21, 0
      %p37 = por %p35, %p36
      %p38 = scmp.ne.s32.totalorder %s26, %s27
      %p39 = scmp.eq.s32.totalorder %s22, 1
      %p40 = por %p38, %p39
      %p42 = scmp.ne.s32.totalorder %s27, %s41
      %p43 = scmp.eq.s32.totalorder %s22, 0
      %p44 = por %p42, %p43
      %s46 = sadd.s32 %s45, 1
      %p49 = scmp.eq.s32.totalorder %s16, 1
      %p50 = scmp.ne.s32.totalorder %s45, %s47
      %p51 = scmp.eq.s32.totalorder %s16, 0
      %p52 = por %p50, %p51
      %p53 = scmp.ne.s32.totalorder %s45, %s47
      %p54 = scmp.eq.s32.totalorder %s21, 1
      %p55 = por %p53, %p54
      %p56 = scmp.ne.s32.totalorder %s47, %s48
      %p57 = scmp.eq.s32.totalorder %s21, 0
      %p58 = por %p56, %p57
      %p59 = scmp.ne.s32.totalorder %s47, %s48
      %p60 = scmp.eq.s32.totalorder %s22, 1
      %p61 = por %p59, %p60
      %p63 = scmp.ne.s32.totalorder %s48, %s62
      %p64 = scmp.eq.s32.totalorder %s22, 0
      %p65 = por %p63, %p64
      %s67 = sadd.s32 %s66, 1
      %p70 = scmp.eq.s32.totalorder %s16, 1
      %p71 = scmp.ne.s32.totalorder %s66, %s68
      %p72 = scmp.eq.s32.totalorder %s16, 0
      %p73 = por %p71, %p72
      %p74 = scmp.ne.s32.totalorder %s66, %s68
      %p75 = scmp.eq.s32.totalorder %s21, 1
      %p76 = por %p74, %p75
      %p77 = scmp.ne.s32.totalorder %s68, %s69
      %p78 = scmp.eq.s32.totalorder %s21, 0
      %p79 = por %p77, %p78
      %p80 = scmp.ne.s32.totalorder %s68, %s69
      %p81 = scmp.eq.s32.totalorder %s22, 1
      %p82 = por %p80, %p81
      %p84 = scmp.ne.s32.totalorder %s69, %s83
      %p85 = scmp.eq.s32.totalorder %s22, 0
      %p86 = por %p84, %p85
      %p87 = scmp.le.s32.totalorder 1, %s16
      %p88 = scmp.lt.s32.totalorder %s16, 3
      %p89 = pnand %p87, %p88
      %p90 = pneg %p89
      // Predicated region
      $region9: #{tpu_custom_call.1} parent=5 // pred_check
        _
      $region10: #{tpu_custom_call.1} parent=5 // pred_check_branch
        %92 = sbr.rel (%p89) target = $region12
      $region11: #{tpu_custom_call.1} parent=5 // pred_region
        %s93 = ssub.s32 %s16, 1
        // Predicated region
        $region13: #{tpu_custom_call.1} parent=11 // pred_check
          %p94 = pneg %p37
        $region14: #{tpu_custom_call.1} parent=11 // pred_check_branch
          %96 = sbr.rel (%p94) target = $region16
        $region15: #{tpu_custom_call.1} parent=11 // pred_region
          %s98 = ssub.s32 128, 128
          %99 = vsyncadd [#allocation5], %s98
          %s101 = sshll.u32 [#allocation4], 4
          %s102 = int_to_ptr.vmem [resolvable:$true] %s101
          %104 = dma.hbm_to_vmem [thread:$0]  %s1, 128, %s102, [#allocation5]
        $region16: #{tpu_custom_call.1} parent=11 // pred_fallthru
          _
        // Predicated region
        $region17: #{tpu_custom_call.1} parent=11 // pred_check
          %p105 = pneg %p58
        $region18: #{tpu_custom_call.1} parent=11 // pred_check_branch
          %107 = sbr.rel (%p105) target = $region20
        $region19: #{tpu_custom_call.1} parent=11 // pred_region
          %s109 = ssub.s32 128, 128
          %110 = vsyncadd [#allocation8], %s109
          %s112 = sshll.u32 [#allocation7], 4
          %s113 = int_to_ptr.vmem [resolvable:$true] %s112
          %115 = dma.hbm_to_vmem [thread:$0]  %s2, 128, %s113, [#allocation8]
        $region20: #{tpu_custom_call.1} parent=11 // pred_fallthru
          _
      $region12: #{tpu_custom_call.1} parent=5 // pred_fallthru
        _
      %p116 = scmp.lt.s32.totalorder %s16, 2
      // Predicated region
      $region21: #{tpu_custom_call.1} parent=5 // pred_check
        %p117 = pneg %p116
      $region22: #{tpu_custom_call.1} parent=5 // pred_check_branch
        %119 = sbr.rel (%p117) target = $region24
      $region23: #{tpu_custom_call.1} parent=5 // pred_region
        _
      $region24: #{tpu_custom_call.1} parent=5 // pred_fallthru
        _
      %p120 = scmp.le.s32.totalorder 1, %s16
      %p121 = scmp.lt.s32.totalorder %s16, 3
      %p122 = pnand %p120, %p121
      %p123 = pneg %p122
      // Predicated region
      $region25: #{tpu_custom_call.1} parent=5 // pred_check
        _
      $region26: #{tpu_custom_call.1} parent=5 // pred_check_branch
        %125 = sbr.rel (%p122) target = $region28
      $region27: #{tpu_custom_call.1} parent=5 // pred_region
        %s126 = ssub.s32 %s16, 1
        // Predicated region
        $region29: #{tpu_custom_call.1} parent=27 // pred_check
          %p127 = pneg %p37
        $region30: #{tpu_custom_call.1} parent=27 // pred_check_branch
          %129 = sbr.rel (%p127) target = $region32
        $region31: #{tpu_custom_call.1} parent=27 // pred_region
          %130 = dma.done [#allocation5], 128
        $region32: #{tpu_custom_call.1} parent=27 // pred_fallthru
          _
        // Predicated region
        $region33: #{tpu_custom_call.1} parent=27 // pred_check
          %p131 = pneg %p58
        $region34: #{tpu_custom_call.1} parent=27 // pred_check_branch
          %133 = sbr.rel (%p131) target = $region36
        $region35: #{tpu_custom_call.1} parent=27 // pred_region
          %134 = dma.done [#allocation8], 128
        $region36: #{tpu_custom_call.1} parent=27 // pred_fallthru
          _
        %p135 = pneg %p37
        %p136 = pneg %p34
        %p137 = pneg %p58
        %p138 = pneg %p55
        %p139 = pneg %p79
        %p140 = pneg %p76
        %v141 = vld [vmem:[#allocation4] sm:$0xff]
        %v142 = vld [vmem:[#allocation7] sm:$0xff]
        %v143 = vadd.f32 %v141, %v142
        %144 = vst [vmem:[#allocation9] sm:$0xff] %v143
        // Predicated region
        $region37: #{tpu_custom_call.1} parent=27 // pred_check
          %p145 = pneg %p76
        $region38: #{tpu_custom_call.1} parent=27 // pred_check_branch
          %147 = sbr.rel (%p145) target = $region40
        $region39: #{tpu_custom_call.1} parent=27 // pred_region
          %s149 = ssub.s32 128, 128
          %150 = vsyncadd [#allocation6], %s149
          %s152 = sshll.u32 [#allocation9], 4
          %s153 = int_to_ptr.vmem [resolvable:$true] %s152
          %155 = dma.vmem_to_hbm [thread:$0]  %s153, 128, %s3, [#allocation6]
        $region40: #{tpu_custom_call.1} parent=27 // pred_fallthru
          _
        // Predicated region
        $region41: #{tpu_custom_call.1} parent=27 // pred_check
          %p156 = pneg %p76
        $region42: #{tpu_custom_call.1} parent=27 // pred_check_branch
          %158 = sbr.rel (%p156) target = $region44
        $region43: #{tpu_custom_call.1} parent=27 // pred_region
          %159 = dma.done [#allocation6], 128
        $region44: #{tpu_custom_call.1} parent=27 // pred_fallthru
          _
      $region28: #{tpu_custom_call.1} parent=5 // pred_fallthru
        _
      %p160 = scmp.le.s32.totalorder 2, %s16
      // Predicated region
      $region45: #{tpu_custom_call.1} parent=5 // pred_check
        %p161 = pneg %p160
      $region46: #{tpu_custom_call.1} parent=5 // pred_check_branch
        %163 = sbr.rel (%p161) target = $region48
      $region47: #{tpu_custom_call.1} parent=5 // pred_region
        %s164 = ssub.s32 %s16, 2
      $region48: #{tpu_custom_call.1} parent=5 // pred_fallthru
        _
    $region6: #{tpu_custom_call.1} parent=1 // loop_footer
      %s20 = sadd.s32 1, %s16
    $region7: #{tpu_custom_call.1} parent=1 // loop_footer_branch
      %15 = sbr.rel target = $region3
    $region8: #{tpu_custom_call.1} parent=1 // loop_exit
      _
    %165 = vsyncpa [#allocation5], 1
    %s166 = scalar_lea.sflag [#allocation5], 1
    %167 = vsyncpa %s166, 1
    %168 = vsyncpa [#allocation8], 1
    %169 = vsyncpa [#allocation6], 1
    %s170 = scalar_lea.sflag [#allocation6], 1
    %171 = vsyncpa %s170, 1

// kernel: tpu_custom_call.1
$region0: #{tpu_custom_call.1}
  #allocation0 [shape = 'u32[]', space=smem, size = 0x4, offset = 0x4, fixed_abs, tag = 'smem constant byte address 0x4 - core index']
  #allocation1 [shape = 'u32[144,128]{1,0:T(1,128)}', space=vmem, size = 0x12000, scoped, tag = 'internal scratch']
  #allocation2 [shape = 's32[1]{0}', space=sflag, size = 0x4, scoped, tag = 'scoped memory for tpu_custom_call.1']
  #allocation3 [shape = 'u8[512]{0}', space=smem, size = 0x200, scoped, tag = 'prefetched SMEM operand 0']
  %s0 = inlined_call_operand.hbm [shape: s32[2], index: 0, kind: input, shape index: {}]
  %s1 = inlined_call_operand.hbm [shape: f32[2,16,8], index: 1, kind: input, shape index: {}]
  %s2 = inlined_call_operand.hbm [shape: f32[2,1,64], index: 2, kind: input, shape index: {}]
  %s3 = inlined_call_operand.hbm [shape: bf16[3,8,64], index: 3, kind: input, shape index: {}]
  %s4 = inlined_call_operand.hbm [shape: f32[1,64], index: 4, kind: input, shape index: {}]
  %s5 = inlined_call_operand.hbm [shape: f32[1,64], index: 5, kind: input, shape index: {}]
  %s6 = inlined_call_operand.hbm [shape: bf16[3,64,64], index: 6, kind: input, shape index: {}]
  %s7 = inlined_call_operand.hbm [shape: f32[1,64], index: 7, kind: input, shape index: {}]
  %s8 = inlined_call_operand.hbm [shape: f32[1,64], index: 8, kind: input, shape index: {}]
  %s9 = inlined_call_operand.hbm [shape: bf16[64,64], index: 9, kind: input, shape index: {}]
  %s10 = inlined_call_operand.hbm [shape: f32[1,64], index: 10, kind: input, shape index: {}]
  %s11 = inlined_call_operand.hbm [shape: bf16[8,64], index: 11, kind: input, shape index: {}]
  %s12 = inlined_call_operand.hbm [shape: f32[1,64], index: 12, kind: input, shape index: {}]
  %s13 = inlined_call_operand.hbm [shape: bf16[2,16,64], index: 13, kind: output, shape index: {}]
  %s14 = sld [smem:[#allocation0]]
  $region129: #{tpu_custom_call.1} parent=0
    _
  %s16 = ssub.s32 1, %s14
  %s17 = scalar_select 0, %s16, %s14
  %19 = dma.hbm_to_smem %s0, 16, [#allocation3], [#allocation2]
  %20 = dma.done [#allocation2], 16
  %21 = sfence
  $region1: #{tpu_custom_call.1} parent=0
    #allocation4 [shape = 'u8[16384]{0}', space=vmem, size = 0x4000, scoped, tag = 'input window, operand 1']
    #allocation5 [shape = 's32[2]{0}', space=sflag, size = 0x8, scoped, tag = 'scoped memory for tpu_custom_call.1']
    #allocation6 [shape = 's32[2]{0}', space=sflag, size = 0x8, scoped, tag = 'scoped memory for tpu_custom_call.1']
    #allocation7 [shape = 'u8[1024]{0}', space=vmem, size = 0x400, scoped, tag = 'input window, operand 2']
    #allocation8 [shape = 's32[2]{0}', space=sflag, size = 0x8, scoped, tag = 'scoped memory for tpu_custom_call.1']
    #allocation9 [shape = 'u8[6144]{0}', space=vmem, size = 0x1800, scoped, tag = 'input window, operand 3, single buffered']
    #allocation10 [shape = 'u8[512]{0}', space=vmem, size = 0x400, scoped, tag = 'input window, operand 4, single buffered']
    #allocation11 [shape = 's32[1]{0}', space=sflag, size = 0x4, scoped, tag = 'scoped memory for tpu_custom_call.1']
    #allocation12 [shape = 'u8[512]{0}', space=vmem, size = 0x400, scoped, tag = 'input window, operand 5, single buffered']
    #allocation13 [shape = 'u8[49152]{0}', space=vmem, size = 0xc000, scoped, tag = 'input window, operand 6, single buffered']
    #allocation14 [shape = 's32[1]{0}', space=sflag, size = 0x4, scoped, tag = 'scoped memory for tpu_custom_call.1']
    #allocation15 [shape = 'u8[512]{0}', space=vmem, size = 0x400, scoped, tag = 'input window, operand 7, single buffered']
    #allocation16 [shape = 'u8[512]{0}', space=vmem, size = 0x400, scoped, tag = 'input window, operand 8, single buffered']
    #allocation17 [shape = 's32[1]{0}', space=sflag, size = 0x4, scoped, tag = 'scoped memory for tpu_custom_call.1']
    #allocation18 [shape = 'u8[16384]{0}', space=vmem, size = 0x4000, scoped, tag = 'input window, operand 9, single buffered']
    #allocation19 [shape = 'u8[512]{0}', space=vmem, size = 0x400, scoped, tag = 'input window, operand 10, single buffered']
    #allocation20 [shape = 's32[1]{0}', space=sflag, size = 0x4, scoped, tag = 'scoped memory for tpu_custom_call.1']
    #allocation21 [shape = 'u8[2048]{0}', space=vmem, size = 0x800, scoped, tag = 'input window, operand 11, single buffered']
    #allocation22 [shape = 'u8[512]{0}', space=vmem, size = 0x400, scoped, tag = 'input window, operand 12, single buffered']
    #allocation23 [shape = 's32[1]{0}', space=sflag, size = 0x4, scoped, tag = 'scoped memory for tpu_custom_call.1']
    #allocation24 [shape = 'u8[8192]{0}', space=vmem, size = 0x2000, scoped, tag = 'output window, operand 0']
    %22 = vsyncpa [#allocation5], 0
    %s23 = scalar_lea.sflag [#allocation5], 1
    %24 = vsyncpa %s23, 0
    %25 = vsyncpa [#allocation8], 0
    %s26 = scalar_lea.sflag [#allocation8], 1
    %27 = vsyncpa %s26, 0
    %28 = vsyncpa [#allocation11], 0
    %29 = vsyncpa [#allocation14], 0
    %30 = vsyncpa [#allocation17], 0
    %31 = vsyncpa [#allocation20], 0
    %32 = vsyncpa [#allocation23], 0
    %33 = vsyncpa [#allocation6], 0
    %s34 = scalar_lea.sflag [#allocation6], 1
    %35 = vsyncpa %s34, 0
    loop: start=0, step=1, limit=4
    $region2: #{tpu_custom_call.1} parent=1 // loop_pre_header
      _
    $region3: #{tpu_custom_call.1} parent=1 // loop_header
      %s37 = sphi 0, %s41
      %p38 = scmp.ge.s32.totalorder %s37, 4
      %s47 = sphi 0, %s49
      %s50 = sphi 0, %s47
      %s51 = sphi 0, %s50
      %s67 = sphi 0, %s51
      %s73 = sphi 0, %s75
      %s76 = sphi 0, %s73
      %s77 = sphi 0, %s76
      %s93 = sphi 0, %s77
      %s97 = sphi 0, %s97
      %s99 = sphi 0, %s97
      %s100 = sphi 0, %s99
      %s114 = sphi 0, %s100
      %s118 = sphi 0, %s118
      %s120 = sphi 0, %s118
      %s121 = sphi 0, %s120
      %s135 = sphi 0, %s121
      %s139 = sphi 0, %s139
      %s141 = sphi 0, %s139
      %s142 = sphi 0, %s141
      %s156 = sphi 0, %s142
      %s160 = sphi 0, %s160
      %s162 = sphi 0, %s160
      %s163 = sphi 0, %s162
      %s177 = sphi 0, %s163
      %s181 = sphi 0, %s181
      %s183 = sphi 0, %s181
      %s184 = sphi 0, %s183
      %s198 = sphi 0, %s184
      %s202 = sphi 0, %s202
      %s204 = sphi 0, %s202
      %s205 = sphi 0, %s204
      %s219 = sphi 0, %s205
      %s223 = sphi 0, %s223
      %s225 = sphi 0, %s223
      %s226 = sphi 0, %s225
      %s240 = sphi 0, %s226
      %s244 = sphi 0, %s244
      %s246 = sphi 0, %s244
      %s247 = sphi 0, %s246
      %s261 = sphi 0, %s247
      %s265 = sphi 0, %s265
      %s267 = sphi 0, %s265
      %s268 = sphi 0, %s267
      %s282 = sphi 0, %s268
      %s286 = sphi 0, %s286
      %s288 = sphi 0, %s286
      %s289 = sphi 0, %s288
      %s303 = sphi 0, %s289
      %s309 = sphi 0, %s311
      %s312 = sphi 0, %s309
      %s313 = sphi 0, %s312
      %s329 = sphi 0, %s313
    $region4: #{tpu_custom_call.1} parent=1 // loop_header_branch
      %40 = sbr.rel (%p38) target = $region8
    $region5: #{tpu_custom_call.1} parent=1 // loop_body
      %s42 = ssub.s32 %s37, 1
      %s43 = ssub.s32 %s37, 2
      %s44 = sadd.s32 %s37, 1
      %s45 = ssub.s32 %s37, %s44
      %p46 = scmp.eq.s32.totalorder %s45, 0
      %s48 = sadd.s32 %s47, 1
      %s49 = scalar_select %p46, %s47, %s48
      %p52 = pneg %p46
      %p53 = scmp.eq.s32.totalorder %s37, 1
      %p54 = por %p52, %p53
      %p55 = scmp.ne.s32.totalorder %s47, %s50
      %p56 = scmp.eq.s32.totalorder %s37, 0
      %p57 = por %p55, %p56
      %p58 = scmp.ne.s32.totalorder %s47, %s50
      %p59 = scmp.eq.s32.totalorder %s42, 1
      %p60 = por %p58, %p59
      %p61 = scmp.ne.s32.totalorder %s50, %s51
      %p62 = scmp.eq.s32.totalorder %s42, 0
      %p63 = por %p61, %p62
      %p64 = scmp.ne.s32.totalorder %s50, %s51
      %p65 = scmp.eq.s32.totalorder %s43, 1
      %p66 = por %p64, %p65
      %p68 = scmp.ne.s32.totalorder %s51, %s67
      %p69 = scmp.eq.s32.totalorder %s43, 0
      %p70 = por %p68, %p69
      %s71 = ssub.s32 %s37, %s44
      %p72 = scmp.eq.s32.totalorder %s71, 0
      %s74 = sadd.s32 %s73, 1
      %s75 = scalar_select %p72, %s73, %s74
      %p78 = pneg %p72
      %p79 = scmp.eq.s32.totalorder %s37, 1
      %p80 = por %p78, %p79
      %p81 = scmp.ne.s32.totalorder %s73, %s76
      %p82 = scmp.eq.s32.totalorder %s37, 0
      %p83 = por %p81, %p82
      %p84 = scmp.ne.s32.totalorder %s73, %s76
      %p85 = scmp.eq.s32.totalorder %s42, 1
      %p86 = por %p84, %p85
      %p87 = scmp.ne.s32.totalorder %s76, %s77
      %p88 = scmp.eq.s32.totalorder %s42, 0
      %p89 = por %p87, %p88
      %p90 = scmp.ne.s32.totalorder %s76, %s77
      %p91 = scmp.eq.s32.totalorder %s43, 1
      %p92 = por %p90, %p91
      %p94 = scmp.ne.s32.totalorder %s77, %s93
      %p95 = scmp.eq.s32.totalorder %s43, 0
      %p96 = por %p94, %p95
      %s98 = sadd.s32 %s97, 1
      %p101 = scmp.eq.s32.totalorder %s37, 1
      %p102 = scmp.ne.s32.totalorder %s97, %s99
      %p103 = scmp.eq.s32.totalorder %s37, 0
      %p104 = por %p102, %p103
      %p105 = scmp.ne.s32.totalorder %s97, %s99
      %p106 = scmp.eq.s32.totalorder %s42, 1
      %p107 = por %p105, %p106
      %p108 = scmp.ne.s32.totalorder %s99, %s100
      %p109 = scmp.eq.s32.totalorder %s42, 0
      %p110 = por %p108, %p109
      %p111 = scmp.ne.s32.totalorder %s99, %s100
      %p112 = scmp.eq.s32.totalorder %s43, 1
      %p113 = por %p111, %p112
      %p115 = scmp.ne.s32.totalorder %s100, %s114
      %p116 = scmp.eq.s32.totalorder %s43, 0
      %p117 = por %p115, %p116
      %s119 = sadd.s32 %s118, 1
      %p122 = scmp.eq.s32.totalorder %s37, 1
      %p123 = scmp.ne.s32.totalorder %s118, %s120
      %p124 = scmp.eq.s32.totalorder %s37, 0
      %p125 = por %p123, %p124
      %p126 = scmp.ne.s32.totalorder %s118, %s120
      %p127 = scmp.eq.s32.totalorder %s42, 1
      %p128 = por %p126, %p127
      %p129 = scmp.ne.s32.totalorder %s120, %s121
      %p130 = scmp.eq.s32.totalorder %s42, 0
      %p131 = por %p129, %p130
      %p132 = scmp.ne.s32.totalorder %s120, %s121
      %p133 = scmp.eq.s32.totalorder %s43, 1
      %p134 = por %p132, %p133
      %p136 = scmp.ne.s32.totalorder %s121, %s135
      %p137 = scmp.eq.s32.totalorder %s43, 0
      %p138 = por %p136, %p137
      %s140 = sadd.s32 %s139, 1
      %p143 = scmp.eq.s32.totalorder %s37, 1
      %p144 = scmp.ne.s32.totalorder %s139, %s141
      %p145 = scmp.eq.s32.totalorder %s37, 0
      %p146 = por %p144, %p145
      %p147 = scmp.ne.s32.totalorder %s139, %s141
      %p148 = scmp.eq.s32.totalorder %s42, 1
      %p149 = por %p147, %p148
      %p150 = scmp.ne.s32.totalorder %s141, %s142
      %p151 = scmp.eq.s32.totalorder %s42, 0
      %p152 = por %p150, %p151
      %p153 = scmp.ne.s32.totalorder %s141, %s142
      %p154 = scmp.eq.s32.totalorder %s43, 1
      %p155 = por %p153, %p154
      %p157 = scmp.ne.s32.totalorder %s142, %s156
      %p158 = scmp.eq.s32.totalorder %s43, 0
      %p159 = por %p157, %p158
      %s161 = sadd.s32 %s160, 1
      %p164 = scmp.eq.s32.totalorder %s37, 1
      %p165 = scmp.ne.s32.totalorder %s160, %s162
      %p166 = scmp.eq.s32.totalorder %s37, 0
      %p167 = por %p165, %p166
      %p168 = scmp.ne.s32.totalorder %s160, %s162
      %p169 = scmp.eq.s32.totalorder %s42, 1
      %p170 = por %p168, %p169
      %p171 = scmp.ne.s32.totalorder %s162, %s163
      %p172 = scmp.eq.s32.totalorder %s42, 0
      %p173 = por %p171, %p172
      %p174 = scmp.ne.s32.totalorder %s162, %s163
      %p175 = scmp.eq.s32.totalorder %s43, 1
      %p176 = por %p174, %p175
      %p178 = scmp.ne.s32.totalorder %s163, %s177
      %p179 = scmp.eq.s32.totalorder %s43, 0
      %p180 = por %p178, %p179
      %s182 = sadd.s32 %s181, 1
      %p185 = scmp.eq.s32.totalorder %s37, 1
      %p186 = scmp.ne.s32.totalorder %s181, %s183
      %p187 = scmp.eq.s32.totalorder %s37, 0
      %p188 = por %p186, %p187
      %p189 = scmp.ne.s32.totalorder %s181, %s183
      %p190 = scmp.eq.s32.totalorder %s42, 1
      %p191 = por %p189, %p190
      %p192 = scmp.ne.s32.totalorder %s183, %s184
      %p193 = scmp.eq.s32.totalorder %s42, 0
      %p194 = por %p192, %p193
      %p195 = scmp.ne.s32.totalorder %s183, %s184
      %p196 = scmp.eq.s32.totalorder %s43, 1
      %p197 = por %p195, %p196
      %p199 = scmp.ne.s32.totalorder %s184, %s198
      %p200 = scmp.eq.s32.totalorder %s43, 0
      %p201 = por %p199, %p200
      %s203 = sadd.s32 %s202, 1
      %p206 = scmp.eq.s32.totalorder %s37, 1
      %p207 = scmp.ne.s32.totalorder %s202, %s204
      %p208 = scmp.eq.s32.totalorder %s37, 0
      %p209 = por %p207, %p208
      %p210 = scmp.ne.s32.totalorder %s202, %s204
      %p211 = scmp.eq.s32.totalorder %s42, 1
      %p212 = por %p210, %p211
      %p213 = scmp.ne.s32.totalorder %s204, %s205
      %p214 = scmp.eq.s32.totalorder %s42, 0
      %p215 = por %p213, %p214
      %p216 = scmp.ne.s32.totalorder %s204, %s205
      %p217 = scmp.eq.s32.totalorder %s43, 1
      %p218 = por %p216, %p217
      %p220 = scmp.ne.s32.totalorder %s205, %s219
      %p221 = scmp.eq.s32.totalorder %s43, 0
      %p222 = por %p220, %p221
      %s224 = sadd.s32 %s223, 1
      %p227 = scmp.eq.s32.totalorder %s37, 1
      %p228 = scmp.ne.s32.totalorder %s223, %s225
      %p229 = scmp.eq.s32.totalorder %s37, 0
      %p230 = por %p228, %p229
      %p231 = scmp.ne.s32.totalorder %s223, %s225
      %p232 = scmp.eq.s32.totalorder %s42, 1
      %p233 = por %p231, %p232
      %p234 = scmp.ne.s32.totalorder %s225, %s226
      %p235 = scmp.eq.s32.totalorder %s42, 0
      %p236 = por %p234, %p235
      %p237 = scmp.ne.s32.totalorder %s225, %s226
      %p238 = scmp.eq.s32.totalorder %s43, 1
      %p239 = por %p237, %p238
      %p241 = scmp.ne.s32.totalorder %s226, %s240
      %p242 = scmp.eq.s32.totalorder %s43, 0
      %p243 = por %p241, %p242
      %s245 = sadd.s32 %s244, 1
      %p248 = scmp.eq.s32.totalorder %s37, 1
      %p249 = scmp.ne.s32.totalorder %s244, %s246
      %p250 = scmp.eq.s32.totalorder %s37, 0
      %p251 = por %p249, %p250
      %p252 = scmp.ne.s32.totalorder %s244, %s246
      %p253 = scmp.eq.s32.totalorder %s42, 1
      %p254 = por %p252, %p253
      %p255 = scmp.ne.s32.totalorder %s246, %s247
      %p256 = scmp.eq.s32.totalorder %s42, 0
      %p257 = por %p255, %p256
      %p258 = scmp.ne.s32.totalorder %s246, %s247
      %p259 = scmp.eq.s32.totalorder %s43, 1
      %p260 = por %p258, %p259
      %p262 = scmp.ne.s32.totalorder %s247, %s261
      %p263 = scmp.eq.s32.totalorder %s43, 0
      %p264 = por %p262, %p263
      %s266 = sadd.s32 %s265, 1
      %p269 = scmp.eq.s32.totalorder %s37, 1
      %p270 = scmp.ne.s32.totalorder %s265, %s267
      %p271 = scmp.eq.s32.totalorder %s37, 0
      %p272 = por %p270, %p271
      %p273 = scmp.ne.s32.totalorder %s265, %s267
      %p274 = scmp.eq.s32.totalorder %s42, 1
      %p275 = por %p273, %p274
      %p276 = scmp.ne.s32.totalorder %s267, %s268
      %p277 = scmp.eq.s32.totalorder %s42, 0
      %p278 = por %p276, %p277
      %p279 = scmp.ne.s32.totalorder %s267, %s268
      %p280 = scmp.eq.s32.totalorder %s43, 1
      %p281 = por %p279, %p280
      %p283 = scmp.ne.s32.totalorder %s268, %s282
      %p284 = scmp.eq.s32.totalorder %s43, 0
      %p285 = por %p283, %p284
      %s287 = sadd.s32 %s286, 1
      %p290 = scmp.eq.s32.totalorder %s37, 1
      %p291 = scmp.ne.s32.totalorder %s286, %s288
      %p292 = scmp.eq.s32.totalorder %s37, 0
      %p293 = por %p291, %p292
      %p294 = scmp.ne.s32.totalorder %s286, %s288
      %p295 = scmp.eq.s32.totalorder %s42, 1
      %p296 = por %p294, %p295
      %p297 = scmp.ne.s32.totalorder %s288, %s289
      %p298 = scmp.eq.s32.totalorder %s42, 0
      %p299 = por %p297, %p298
      %p300 = scmp.ne.s32.totalorder %s288, %s289
      %p301 = scmp.eq.s32.totalorder %s43, 1
      %p302 = por %p300, %p301
      %p304 = scmp.ne.s32.totalorder %s289, %s303
      %p305 = scmp.eq.s32.totalorder %s43, 0
      %p306 = por %p304, %p305
      %s307 = ssub.s32 %s37, %s44
      %p308 = scmp.eq.s32.totalorder %s307, 0
      %s310 = sadd.s32 %s309, 1
      %s311 = scalar_select %p308, %s309, %s310
      %p314 = pneg %p308
      %p315 = scmp.eq.s32.totalorder %s37, 1
      %p316 = por %p314, %p315
      %p317 = scmp.ne.s32.totalorder %s309, %s312
      %p318 = scmp.eq.s32.totalorder %s37, 0
      %p319 = por %p317, %p318
      %p320 = scmp.ne.s32.totalorder %s309, %s312
      %p321 = scmp.eq.s32.totalorder %s42, 1
      %p322 = por %p320, %p321
      %p323 = scmp.ne.s32.totalorder %s312, %s313
      %p324 = scmp.eq.s32.totalorder %s42, 0
      %p325 = por %p323, %p324
      %p326 = scmp.ne.s32.totalorder %s312, %s313
      %p327 = scmp.eq.s32.totalorder %s43, 1
      %p328 = por %p326, %p327
      %p330 = scmp.ne.s32.totalorder %s313, %s329
      %p331 = scmp.eq.s32.totalorder %s43, 0
      %p332 = por %p330, %p331
      %p333 = scmp.le.s32.totalorder 1, %s37
      %p334 = scmp.lt.s32.totalorder %s37, 3
      %p335 = pnand %p333, %p334
      %p336 = pneg %p335
      // Predicated region
      $region9: #{tpu_custom_call.1} parent=5 // pred_check
        _
      $region10: #{tpu_custom_call.1} parent=5 // pred_check_branch
        %338 = sbr.rel (%p335) target = $region12
      $region11: #{tpu_custom_call.1} parent=5 // pred_region
        %s339 = ssub.s32 %s37, 1
        // Predicated region
        $region13: #{tpu_custom_call.1} parent=11 // pred_check
          %p340 = pneg %p110
        $region14: #{tpu_custom_call.1} parent=11 // pred_check_branch
          %342 = sbr.rel (%p340) target = $region16
        $region15: #{tpu_custom_call.1} parent=11 // pred_region
          %s344 = ssub.s32 192, 192
          %345 = vsyncadd [#allocation8], %s344
          %s346 = sshll.u32 [#allocation9], 4
          %s347 = int_to_ptr.vmem [resolvable:$true] %s346
          %352 = dma.hbm_to_vmem [thread:$0]  %s3, 192, %s347, [#allocation8], 64, 64, 4
        $region16: #{tpu_custom_call.1} parent=11 // pred_fallthru
          _
        // Predicated region
        $region17: #{tpu_custom_call.1} parent=11 // pred_check
          %p353 = pneg %p131
        $region18: #{tpu_custom_call.1} parent=11 // pred_check_branch
          %355 = sbr.rel (%p353) target = $region20
        $region19: #{tpu_custom_call.1} parent=11 // pred_region
          %s357 = ssub.s32 16, 16
          %358 = vsyncadd [#allocation11], %s357
          %s360 = sshll.u32 [#allocation10], 4
          %s361 = int_to_ptr.vmem [resolvable:$true] %s360
          %363 = dma.hbm_to_vmem [thread:$0]  %s4, 16, %s361, [#allocation11]
        $region20: #{tpu_custom_call.1} parent=11 // pred_fallthru
          _
        // Predicated region
        $region21: #{tpu_custom_call.1} parent=11 // pred_check
          %p364 = pneg %p152
        $region22: #{tpu_custom_call.1} parent=11 // pred_check_branch
          %366 = sbr.rel (%p364) target = $region24
        $region23: #{tpu_custom_call.1} parent=11 // pred_region
          %s368 = ssub.s32 16, 16
          %369 = vsyncadd [#allocation11], %s368
          %s371 = sshll.u32 [#allocation12], 4
          %s372 = int_to_ptr.vmem [resolvable:$true] %s371
          %374 = dma.hbm_to_vmem [thread:$0]  %s5, 16, %s372, [#allocation11]
        $region24: #{tpu_custom_call.1} parent=11 // pred_fallthru
          _
        // Predicated region
        $region25: #{tpu_custom_call.1} parent=11 // pred_check
          %p375 = pneg %p173
        $region26: #{tpu_custom_call.1} parent=11 // pred_check_branch
          %377 = sbr.rel (%p375) target = $region28
        $region27: #{tpu_custom_call.1} parent=11 // pred_region
          %s379 = ssub.s32 1536, 1536
          %380 = vsyncadd [#allocation14], %s379
          %s381 = sshll.u32 [#allocation13], 4
          %s382 = int_to_ptr.vmem [resolvable:$true] %s381
          %387 = dma.hbm_to_vmem [thread:$0]  %s6, 1536, %s382, [#allocation14], 64, 64, 4
        $region28: #{tpu_custom_call.1} parent=11 // pred_fallthru
          _
        // Predicated region
        $region29: #{tpu_custom_call.1} parent=11 // pred_check
          %p388 = pneg %p194
        $region30: #{tpu_custom_call.1} parent=11 // pred_check_branch
          %390 = sbr.rel (%p388) target = $region32
        $region31: #{tpu_custom_call.1} parent=11 // pred_region
          %s392 = ssub.s32 16, 16
          %393 = vsyncadd [#allocation14], %s392
          %s395 = sshll.u32 [#allocation15], 4
          %s396 = int_to_ptr.vmem [resolvable:$true] %s395
          %398 = dma.hbm_to_vmem [thread:$0]  %s7, 16, %s396, [#allocation14]
        $region32: #{tpu_custom_call.1} parent=11 // pred_fallthru
          _
        // Predicated region
        $region33: #{tpu_custom_call.1} parent=11 // pred_check
          %p399 = pneg %p215
        $region34: #{tpu_custom_call.1} parent=11 // pred_check_branch
          %401 = sbr.rel (%p399) target = $region36
        $region35: #{tpu_custom_call.1} parent=11 // pred_region
          %s403 = ssub.s32 16, 16
          %404 = vsyncadd [#allocation17], %s403
          %s406 = sshll.u32 [#allocation16], 4
          %s407 = int_to_ptr.vmem [resolvable:$true] %s406
          %409 = dma.hbm_to_vmem [thread:$0]  %s8, 16, %s407, [#allocation17]
        $region36: #{tpu_custom_call.1} parent=11 // pred_fallthru
          _
        // Predicated region
        $region37: #{tpu_custom_call.1} parent=11 // pred_check
          %p410 = pneg %p236
        $region38: #{tpu_custom_call.1} parent=11 // pred_check_branch
          %412 = sbr.rel (%p410) target = $region40
        $region39: #{tpu_custom_call.1} parent=11 // pred_region
          %s414 = ssub.s32 512, 512
          %415 = vsyncadd [#allocation17], %s414
          %s416 = sshll.u32 [#allocation18], 4
          %s417 = int_to_ptr.vmem [resolvable:$true] %s416
          %422 = dma.hbm_to_vmem [thread:$0]  %s9, 512, %s417, [#allocation17], 64, 64, 4
        $region40: #{tpu_custom_call.1} parent=11 // pred_fallthru
          _
        // Predicated region
        $region41: #{tpu_custom_call.1} parent=11 // pred_check
          %p423 = pneg %p257
        $region42: #{tpu_custom_call.1} parent=11 // pred_check_branch
          %425 = sbr.rel (%p423) target = $region44
        $region43: #{tpu_custom_call.1} parent=11 // pred_region
          %s427 = ssub.s32 16, 16
          %428 = vsyncadd [#allocation20], %s427
          %s430 = sshll.u32 [#allocation19], 4
          %s431 = int_to_ptr.vmem [resolvable:$true] %s430
          %433 = dma.hbm_to_vmem [thread:$0]  %s10, 16, %s431, [#allocation20]
        $region44: #{tpu_custom_call.1} parent=11 // pred_fallthru
          _
        // Predicated region
        $region45: #{tpu_custom_call.1} parent=11 // pred_check
          %p434 = pneg %p278
        $region46: #{tpu_custom_call.1} parent=11 // pred_check_branch
          %436 = sbr.rel (%p434) target = $region48
        $region47: #{tpu_custom_call.1} parent=11 // pred_region
          %s438 = ssub.s32 64, 64
          %439 = vsyncadd [#allocation20], %s438
          %s441 = sshll.u32 [#allocation21], 4
          %s442 = int_to_ptr.vmem [resolvable:$true] %s441
          %444 = dma.hbm_to_vmem [thread:$0]  %s11, 64, %s442, [#allocation20]
        $region48: #{tpu_custom_call.1} parent=11 // pred_fallthru
          _
        // Predicated region
        $region49: #{tpu_custom_call.1} parent=11 // pred_check
          %p445 = pneg %p299
        $region50: #{tpu_custom_call.1} parent=11 // pred_check_branch
          %447 = sbr.rel (%p445) target = $region52
        $region51: #{tpu_custom_call.1} parent=11 // pred_region
          %s449 = ssub.s32 16, 16
          %450 = vsyncadd [#allocation23], %s449
          %s452 = sshll.u32 [#allocation22], 4
          %s453 = int_to_ptr.vmem [resolvable:$true] %s452
          %455 = dma.hbm_to_vmem [thread:$0]  %s12, 16, %s453, [#allocation23]
        $region52: #{tpu_custom_call.1} parent=11 // pred_fallthru
          _
      $region12: #{tpu_custom_call.1} parent=5 // pred_fallthru
        _
      %p456 = scmp.lt.s32.totalorder %s37, 2
      // Predicated region
      $region53: #{tpu_custom_call.1} parent=5 // pred_check
        %p457 = pneg %p456
      $region54: #{tpu_custom_call.1} parent=5 // pred_check_branch
        %459 = sbr.rel (%p457) target = $region56
      $region55: #{tpu_custom_call.1} parent=5 // pred_region
        // Predicated region
        $region57: #{tpu_custom_call.1} parent=55 // pred_check
          %p460 = pneg %p57
        $region58: #{tpu_custom_call.1} parent=55 // pred_check_branch
          %462 = sbr.rel (%p460) target = $region60
        $region59: #{tpu_custom_call.1} parent=55 // pred_region
          %s463 = sand.u32 %s47, 1
          %s464 = scalar_lea.sflag [#allocation5], %s463
          %s465 = sand.u32 %s47, 1
          %s466 = smul.addr %s465, 16
          %s467 = scalar_lea.vmem [#allocation4], %s466
          %s469 = ssub.s32 256, 256
          %470 = vsyncadd %s464, %s469
          %s471 = smul.addr %s37, 2
          %s472 = smul.addr %s471, 128
          %s473 = scalar_lea.hbm %s1, %s472
          %s474 = sshll.u32 %s467, 4
          %s475 = int_to_ptr.vmem [resolvable:$true] %s474
          %480 = dma.hbm_to_vmem [thread:$0]  %s473, 256, %s475, %s464, 128, 128, 8
        $region60: #{tpu_custom_call.1} parent=55 // pred_fallthru
          _
        // Predicated region
        $region61: #{tpu_custom_call.1} parent=55 // pred_check
          %p481 = pneg %p83
        $region62: #{tpu_custom_call.1} parent=55 // pred_check_branch
          %483 = sbr.rel (%p481) target = $region64
        $region63: #{tpu_custom_call.1} parent=55 // pred_region
          %s484 = sand.u32 %s37, 1
          %s485 = scalar_lea.sflag [#allocation8], %s484
          %s486 = sand.u32 %s73, 1
          %s487 = scalar_lea.vmem [#allocation7], %s486
          %s489 = ssub.s32 16, 16
          %490 = vsyncadd %s485, %s489
          %s491 = smul.addr %s37, 16
          %s492 = scalar_lea.hbm %s2, %s491
          %s494 = sshll.u32 %s487, 4
          %s495 = int_to_ptr.vmem [resolvable:$true] %s494
          %497 = dma.hbm_to_vmem [thread:$0]  %s492, 16, %s495, %s485
        $region64: #{tpu_custom_call.1} parent=55 // pred_fallthru
          _
      $region56: #{tpu_custom_call.1} parent=5 // pred_fallthru
        _
      %p498 = scmp.le.s32.totalorder 1, %s37
      %p499 = scmp.lt.s32.totalorder %s37, 3
      %p500 = pnand %p498, %p499
      %p501 = pneg %p500
      // Predicated region
      $region65: #{tpu_custom_call.1} parent=5 // pred_check
        _
      $region66: #{tpu_custom_call.1} parent=5 // pred_check_branch
        %503 = sbr.rel (%p500) target = $region68
      $region67: #{tpu_custom_call.1} parent=5 // pred_region
        %s504 = ssub.s32 %s37, 1
        %s505 = sand.u32 %s50, 1
        %s506 = scalar_lea.sflag [#allocation5], %s505
        %s507 = sand.u32 %s50, 1
        %s508 = smul.addr %s507, 16
        %s509 = scalar_lea.vmem [#allocation4], %s508
        // Predicated region
        $region69: #{tpu_custom_call.1} parent=67 // pred_check
          %p510 = pneg %p63
        $region70: #{tpu_custom_call.1} parent=67 // pred_check_branch
          %512 = sbr.rel (%p510) target = $region72
        $region71: #{tpu_custom_call.1} parent=67 // pred_region
          %513 = dma.done %s506, 256
        $region72: #{tpu_custom_call.1} parent=67 // pred_fallthru
          _
        %s514 = sand.u32 %s42, 1
        %s515 = scalar_lea.sflag [#allocation8], %s514
        %s516 = sand.u32 %s76, 1
        %s517 = scalar_lea.vmem [#allocation7], %s516
        // Predicated region
        $region73: #{tpu_custom_call.1} parent=67 // pred_check
          %p518 = pneg %p89
        $region74: #{tpu_custom_call.1} parent=67 // pred_check_branch
          %520 = sbr.rel (%p518) target = $region76
        $region75: #{tpu_custom_call.1} parent=67 // pred_region
          %521 = dma.done %s515, 16
        $region76: #{tpu_custom_call.1} parent=67 // pred_fallthru
          _
        // Predicated region
        $region77: #{tpu_custom_call.1} parent=67 // pred_check
          %p522 = pneg %p110
        $region78: #{tpu_custom_call.1} parent=67 // pred_check_branch
          %524 = sbr.rel (%p522) target = $region80
        $region79: #{tpu_custom_call.1} parent=67 // pred_region
          %525 = dma.done [#allocation8], 192
        $region80: #{tpu_custom_call.1} parent=67 // pred_fallthru
          _
        // Predicated region
        $region81: #{tpu_custom_call.1} parent=67 // pred_check
          %p526 = pneg %p131
        $region82: #{tpu_custom_call.1} parent=67 // pred_check_branch
          %528 = sbr.rel (%p526) target = $region84
        $region83: #{tpu_custom_call.1} parent=67 // pred_region
          %529 = dma.done [#allocation11], 16
        $region84: #{tpu_custom_call.1} parent=67 // pred_fallthru
          _
        // Predicated region
        $region85: #{tpu_custom_call.1} parent=67 // pred_check
          %p530 = pneg %p152
        $region86: #{tpu_custom_call.1} parent=67 // pred_check_branch
          %532 = sbr.rel (%p530) target = $region88
        $region87: #{tpu_custom_call.1} parent=67 // pred_region
          %533 = dma.done [#allocation11], 16
        $region88: #{tpu_custom_call.1} parent=67 // pred_fallthru
          _
        // Predicated region
        $region89: #{tpu_custom_call.1} parent=67 // pred_check
          %p534 = pneg %p173
        $region90: #{tpu_custom_call.1} parent=67 // pred_check_branch
          %536 = sbr.rel (%p534) target = $region92
        $region91: #{tpu_custom_call.1} parent=67 // pred_region
          %537 = dma.done [#allocation14], 1536
        $region92: #{tpu_custom_call.1} parent=67 // pred_fallthru
          _
        // Predicated region
        $region93: #{tpu_custom_call.1} parent=67 // pred_check
          %p538 = pneg %p194
        $region94: #{tpu_custom_call.1} parent=67 // pred_check_branch
          %540 = sbr.rel (%p538) target = $region96
        $region95: #{tpu_custom_call.1} parent=67 // pred_region
          %541 = dma.done [#allocation14], 16
        $region96: #{tpu_custom_call.1} parent=67 // pred_fallthru
          _
        // Predicated region
        $region97: #{tpu_custom_call.1} parent=67 // pred_check
          %p542 = pneg %p215
        $region98: #{tpu_custom_call.1} parent=67 // pred_check_branch
          %544 = sbr.rel (%p542) target = $region100
        $region99: #{tpu_custom_call.1} parent=67 // pred_region
          %545 = dma.done [#allocation17], 16
        $region100: #{tpu_custom_call.1} parent=67 // pred_fallthru
          _
        // Predicated region
        $region101: #{tpu_custom_call.1} parent=67 // pred_check
          %p546 = pneg %p236
        $region102: #{tpu_custom_call.1} parent=67 // pred_check_branch
          %548 = sbr.rel (%p546) target = $region104
        $region103: #{tpu_custom_call.1} parent=67 // pred_region
          %549 = dma.done [#allocation17], 512
        $region104: #{tpu_custom_call.1} parent=67 // pred_fallthru
          _
        // Predicated region
        $region105: #{tpu_custom_call.1} parent=67 // pred_check
          %p550 = pneg %p257
        $region106: #{tpu_custom_call.1} parent=67 // pred_check_branch
          %552 = sbr.rel (%p550) target = $region108
        $region107: #{tpu_custom_call.1} parent=67 // pred_region
          %553 = dma.done [#allocation20], 16
        $region108: #{tpu_custom_call.1} parent=67 // pred_fallthru
          _
        // Predicated region
        $region109: #{tpu_custom_call.1} parent=67 // pred_check
          %p554 = pneg %p278
        $region110: #{tpu_custom_call.1} parent=67 // pred_check_branch
          %556 = sbr.rel (%p554) target = $region112
        $region111: #{tpu_custom_call.1} parent=67 // pred_region
          %557 = dma.done [#allocation20], 64
        $region112: #{tpu_custom_call.1} parent=67 // pred_fallthru
          _
        // Predicated region
        $region113: #{tpu_custom_call.1} parent=67 // pred_check
          %p558 = pneg %p299
        $region114: #{tpu_custom_call.1} parent=67 // pred_check_branch
          %560 = sbr.rel (%p558) target = $region116
        $region115: #{tpu_custom_call.1} parent=67 // pred_region
          %561 = dma.done [#allocation23], 16
        $region116: #{tpu_custom_call.1} parent=67 // pred_fallthru
          _
        %s562 = sand.u32 %s50, 1
        %s563 = scalar_lea.sflag [#allocation5], %s562
        %s564 = sand.u32 %s50, 1
        %s565 = smul.addr %s564, 16
        %s566 = scalar_lea.vmem [#allocation4], %s565
        %p567 = pneg %p63
        %p568 = pneg %p60
        %s569 = sand.u32 %s42, 1
        %s570 = scalar_lea.sflag [#allocation8], %s569
        %s571 = sand.u32 %s76, 1
        %s572 = scalar_lea.vmem [#allocation7], %s571
        %p573 = pneg %p89
        %p574 = pneg %p86
        %p575 = pneg %p110
        %p576 = pneg %p107
        %p577 = pneg %p131
        %p578 = pneg %p128
        %p579 = pneg %p152
        %p580 = pneg %p149
        %p581 = pneg %p173
        %p582 = pneg %p170
        %p583 = pneg %p194
        %p584 = pneg %p191
        %p585 = pneg %p215
        %p586 = pneg %p212
        %p587 = pneg %p236
        %p588 = pneg %p233
        %p589 = pneg %p257
        %p590 = pneg %p254
        %p591 = pneg %p278
        %p592 = pneg %p275
        %p593 = pneg %p299
        %p594 = pneg %p296
        %p595 = pneg %p325
        %p596 = pneg %p322
        %s597 = sand.u32 %s312, 1
        %s598 = scalar_lea.sflag [#allocation6], %s597
        %s599 = sand.u32 %s312, 1
        %s600 = smul.addr %s599, 8
        %s601 = scalar_lea.vmem [#allocation24], %s600
        %v603 = vld [vmem:[%s509] sm:$0xff]
        %v604 = vld [vmem:[%s509 + $0x8] sm:$0xff]
        %v605 = vld [vmem:[%s517] sm:$0x1]
        %s606 = sld [smem:[#allocation3 + %s42]]
        %v607 = vlaneseq
        %v608 = vshrl.u32 %v607, 7
        %v609 = vadd.s32 %v608, 8
        %v610 = vstv %s606
        %vm611 = vcmp.lt.s32.totalorder %v608, %v610
        %vm612 = vcmp.lt.s32.totalorder %v609, %v610
        %v613 = vsel %vm611, 1, 0
        %v614 = vsel %vm612, 1, 0
        %v615 = vcvt.s32.f32 %v613
        %v616 = vcvt.s32.f32 %v614
        %v617 = vmul.f32 %v603, %v615
        %v618 = vmul.f32 %v604, %v616
        %vm621 = vcmask 1040384
        %v622 = vrot.slane %v617, 7
        %v623 = vrot.slane %v618, 7
        %v624 = vsel %vm621, %v622, %v623
        %v627 = vsel %vm621, 0.0, %v622
        %vm628 = vcmask 1046528
        %v629 = vrot.slane %v617, 1
        %v630 = vrot.slane %v618, 1
        %v631 = vsel %vm628, %v629, %v630
        %v634 = vsel %vm628, %v630, 0.0
        %v635 = vld [vmem:[#allocation9] sm:$0xf]
        %v636 = vpack.c.bf16 %v624, %v627
        %s637 = scalar_lea.vmem [#allocation9], 4
        %v638 = vld [vmem:[%s637] sm:$0xf]
        %v639 = vpack.c.bf16 %v618, %v617
        %vm640 = vcmask 64512
        %v642 = vsel %vm640, %v639, 0
        %vm644 = vcmask 1043456
        %v646 = vsel %vm644, %v638, 0
        %648 = vmatprep.subr.bf16.mxu0 0
        %649 = vmatpush1.bf16.msra.mxu0 %v646
        %650 = vmatprep.subr.bf16.mxu0 0
        %651 = vmatpush1.bf16.msra.mxu0 0
        %652 = vmatprep.subr.bf16.mxu0 0
        %653 = vmatpush1.bf16.msra.mxu0 0
        %654 = vmatprep.subr.bf16.mxu0 0
        %655 = vmatpush1.bf16.msra.mxu0 0
        %656 = vmatprep.subr.bf16.mxu0 0
        %657 = vmatpush1.bf16.msra.mxu0 0
        %658 = vmatprep.subr.bf16.mxu0 0
        %659 = vmatpush1.bf16.msra.mxu0 0
        %660 = vmatprep.subr.bf16.mxu0 0
        %661 = vmatpush1.bf16.msra.mxu0 0
        %662 = vmatprep.subr.bf16.mxu0 0
        %663 = vmatpush1.bf16.msra.mxu0 0
        %664 = vmatprep.subr.bf16.mxu0 0
        %665 = vmatpush1.bf16.msra.mxu0 0
        %666 = vmatprep.subr.bf16.mxu0 0
        %667 = vmatpush1.bf16.msra.mxu0 0
        %668 = vmatprep.subr.bf16.mxu0 0
        %669 = vmatpush1.bf16.msra.mxu0 0
        %670 = vmatprep.subr.bf16.mxu0 0
        %671 = vmatpush1.bf16.msra.mxu0 0
        %672 = vmatprep.subr.bf16.mxu0 0
        %673 = vmatpush1.bf16.msra.mxu0 0
        %674 = vmatprep.subr.bf16.mxu0 0
        %675 = vmatpush1.bf16.msra.mxu0 0
        %676 = vmatprep.subr.bf16.mxu0 0
        %677 = vmatpush1.bf16.msra.mxu0 0
        %678 = vmatprep.subr.bf16.mxu0 0
        %679 = vmatpush1.bf16.msra.mxu0 0
        %680 = vmatprep.mubr.bf16.mxu0 0
        %681 = vmatmul.mubr.bf16.gmra.mrb[0].mxu0 %v642
        %v682 = vpop.f32.mrb[0].mxu0
        %v683 = vadd.f32 0.0, %v682
        %v684 = vpop.f32.mrb[0].mxu0
        %v685 = vpop.f32.mrb[0].mxu0
        %v686 = vadd.f32 0.0, %v685
        %v687 = vpop.f32.mrb[0].mxu0
        %688 = vdwg.mxu0
        %v690 = vsel %vm640, %v636, 0
        %v693 = vsel %vm644, %v635, 0
        %695 = vmatprep.subr.bf16.mxu0 0
        %696 = vmatpush1.bf16.msra.mxu0 %v693
        %697 = vmatprep.subr.bf16.mxu0 0
        %698 = vmatpush1.bf16.msra.mxu0 0
        %699 = vmatprep.subr.bf16.mxu0 0
        %700 = vmatpush1.bf16.msra.mxu0 0
        %701 = vmatprep.subr.bf16.mxu0 0
        %702 = vmatpush1.bf16.msra.mxu0 0
        %703 = vmatprep.subr.bf16.mxu0 0
        %704 = vmatpush1.bf16.msra.mxu0 0
        %705 = vmatprep.subr.bf16.mxu0 0
        %706 = vmatpush1.bf16.msra.mxu0 0
        %707 = vmatprep.subr.bf16.mxu0 0
        %708 = vmatpush1.bf16.msra.mxu0 0
        %709 = vmatprep.subr.bf16.mxu0 0
        %710 = vmatpush1.bf16.msra.mxu0 0
        %711 = vmatprep.subr.bf16.mxu0 0
        %712 = vmatpush1.bf16.msra.mxu0 0
        %713 = vmatprep.subr.bf16.mxu0 0
        %714 = vmatpush1.bf16.msra.mxu0 0
        %715 = vmatprep.subr.bf16.mxu0 0
        %716 = vmatpush1.bf16.msra.mxu0 0
        %717 = vmatprep.subr.bf16.mxu0 0
        %718 = vmatpush1.bf16.msra.mxu0 0
        %719 = vmatprep.subr.bf16.mxu0 0
        %720 = vmatpush1.bf16.msra.mxu0 0
        %721 = vmatprep.subr.bf16.mxu0 0
        %722 = vmatpush1.bf16.msra.mxu0 0
        %723 = vmatprep.subr.bf16.mxu0 0
        %724 = vmatpush1.bf16.msra.mxu0 0
        %725 = vmatprep.subr.bf16.mxu0 0
        %726 = vmatpush1.bf16.msra.mxu0 0
        %727 = vmatprep.mubr.bf16.mxu0 0
        %728 = vmatmul.mubr.bf16.gmra.mrb[0].mxu0 %v690
        %v729 = vpop.f32.mrb[0].mxu0
        %v730 = vadd.f32 %v683, %v729
        %v731 = vpop.f32.mrb[0].mxu0
        %v732 = vpop.f32.mrb[0].mxu0
        %v733 = vadd.f32 %v686, %v732
        %v734 = vpop.f32.mrb[0].mxu0
        %735 = vdwg.mxu0
        %s736 = scalar_lea.vmem [#allocation9], 8
        %v737 = vld [vmem:[%s736] sm:$0xf]
        %v738 = vpack.c.bf16 %v634, %v631
        %v740 = vsel %vm640, %v738, 0
        %v743 = vsel %vm644, %v737, 0
        %745 = vmatprep.subr.bf16.mxu0 0
        %746 = vmatpush1.bf16.msra.mxu0 %v743
        %747 = vmatprep.subr.bf16.mxu0 0
        %748 = vmatpush1.bf16.msra.mxu0 0
        %749 = vmatprep.subr.bf16.mxu0 0
        %750 = vmatpush1.bf16.msra.mxu0 0
        %751 = vmatprep.subr.bf16.mxu0 0
        %752 = vmatpush1.bf16.msra.mxu0 0
        %753 = vmatprep.subr.bf16.mxu0 0
        %754 = vmatpush1.bf16.msra.mxu0 0
        %755 = vmatprep.subr.bf16.mxu0 0
        %756 = vmatpush1.bf16.msra.mxu0 0
        %757 = vmatprep.subr.bf16.mxu0 0
        %758 = vmatpush1.bf16.msra.mxu0 0
        %759 = vmatprep.subr.bf16.mxu0 0
        %760 = vmatpush1.bf16.msra.mxu0 0
        %761 = vmatprep.subr.bf16.mxu0 0
        %762 = vmatpush1.bf16.msra.mxu0 0
        %763 = vmatprep.subr.bf16.mxu0 0
        %764 = vmatpush1.bf16.msra.mxu0 0
        %765 = vmatprep.subr.bf16.mxu0 0
        %766 = vmatpush1.bf16.msra.mxu0 0
        %767 = vmatprep.subr.bf16.mxu0 0
        %768 = vmatpush1.bf16.msra.mxu0 0
        %769 = vmatprep.subr.bf16.mxu0 0
        %770 = vmatpush1.bf16.msra.mxu0 0
        %771 = vmatprep.subr.bf16.mxu0 0
        %772 = vmatpush1.bf16.msra.mxu0 0
        %773 = vmatprep.subr.bf16.mxu0 0
        %774 = vmatpush1.bf16.msra.mxu0 0
        %775 = vmatprep.subr.bf16.mxu0 0
        %776 = vmatpush1.bf16.msra.mxu0 0
        %777 = vmatprep.mubr.bf16.mxu0 0
        %778 = vmatmul.mubr.bf16.gmra.mrb[0].mxu0 %v740
        %v779 = vpop.f32.mrb[0].mxu0
        %v780 = vadd.f32 0.0, %v779
        %v781 = vpop.f32.mrb[0].mxu0
        %v782 = vpop.f32.mrb[0].mxu0
        %v783 = vadd.f32 0.0, %v782
        %v784 = vpop.f32.mrb[0].mxu0
        %785 = vdwg.mxu0
        %v786 = vadd.f32 %v730, %v780
        %v787 = vadd.f32 %v733, %v783
        %v788 = vld [vmem:[#allocation10] sm:$0x1]
        %v790 = vlaneseq
        %v791 = vshrl.u32 %v790, 7
        %v792 = vsub.s32 0, %v791
        %v793 = vrot.slane %v788, %v792
        %v795 = vadd.f32 %v786, %v793
        %v796 = vadd.f32 %v787, %v793
        %v797 = vmul.f32 %v795, %v795
        %v798 = vmul.f32 %v796, %v796
        %vm799 = vcmask 523264
        %v800 = vsel %vm799, %v797, 0.0
        %801 = vadd.xlane.f32.xlu0 %v800
        %v802 = vpop.xlane.xlu0 %801
        %v803 = vsel %vm799, %v798, 0.0
        %804 = vadd.xlane.f32.xlu0 %v803
        %v805 = vpop.xlane.xlu0 %804
        %v806 = vrcp.pop 64.0
        %v807 = vmul.f32 %v802, %v806
        %v808 = vmul.f32 %v805, %v806
        %v809 = vadd.f32 %v807, 1e-06
        %v810 = vadd.f32 %v808, 1e-06
        %v811 = vrsqrt.pop %v809
        %v812 = vrsqrt.pop %v810
        %v813 = vmul.f32 %v795, %v811
        %v814 = vmul.f32 %v796, %v812
        %v815 = vld [vmem:[#allocation12] sm:$0x1]
        %v817 = vlaneseq
        %v818 = vshrl.u32 %v817, 7
        %v819 = vsub.s32 0, %v818
        %v820 = vrot.slane %v815, %v819
        %v822 = vmul.f32 %v813, %v820
        %v823 = vmul.f32 %v814, %v820
        %v824 = vxor.u32 %v822, 2147483648
        %v825 = vxor.u32 %v823, 2147483648
        %v826 = vmul.f32 %v824, 1.442695
        %v827 = vpow.pop %v826
        %v828 = vmul.f32 %v825, 1.442695
        %v829 = vpow.pop %v828
        %v830 = vadd.f32 %v827, 1.0
        %v831 = vadd.f32 %v829, 1.0
        %v832 = vrcp.pop %v830
        %v833 = vmul.f32 1.0, %v832
        %v834 = vrcp.pop %v831
        %v835 = vmul.f32 1.0, %v834
        %v836 = vmul.f32 %v822, %v833
        %v837 = vmul.f32 %v823, %v835
        %v838 = vmul.f32 %v836, %v615
        %v839 = vmul.f32 %v837, %v616
        %v840 = vxor.u32 %v605, 2147483648
        %v841 = vmul.f32 %v840, 1.442695
        %v842 = vpow.pop %v841
        %v843 = vadd.f32 %v842, 1.0
        %v844 = vrcp.pop %v843
        %v845 = vmul.f32 1.0, %v844
        %v846 = vmul.f32 %v605, %v845
        %v847 = vld [vmem:[#allocation18] sm:$0xf]
        %v848 = vld [vmem:[#allocation18 + $0x4] sm:$0xf]
        %v849 = vld [vmem:[#allocation18 + $0x8] sm:$0xf]
        %v850 = vld [vmem:[#allocation18 + $0xc] sm:$0xf]
        %v851 = vld [vmem:[#allocation18 + $0x10] sm:$0xf]
        %v852 = vld [vmem:[#allocation18 + $0x14] sm:$0xf]
        %v853 = vld [vmem:[#allocation18 + $0x18] sm:$0xf]
        %v854 = vld [vmem:[#allocation18 + $0x1c] sm:$0xf]
        %v855 = vpack.c.bf16 %v846, %v846
        %v856 = vld [vmem:[#allocation19] sm:$0x1]
        %v865 = vunpack.c.l.b16 %v847
        %v866 = vunpack.c.l.b16 %v848
        %v867 = vunpack.c.l.b16 %v849
        %v868 = vunpack.c.l.b16 %v850
        %v869 = vunpack.c.l.b16 %v851
        %v870 = vunpack.c.l.b16 %v852
        %v871 = vunpack.c.l.b16 %v853
        %v872 = vunpack.c.l.b16 %v854
        %v873 = vpack.c.b16 %v866, %v865
        %v874 = vpack.c.b16 %v868, %v867
        %v875 = vpack.c.b16 %v870, %v869
        %v876 = vpack.c.b16 %v872, %v871
        %v882 = vsel %vm799, %v855, 0
        %884 = vmatprep.subr.bf16.mxu0 0
        %885 = vmatpush1.bf16.msra.mxu0 %v873
        %886 = vmatprep.subr.bf16.mxu0 0
        %887 = vmatpush1.bf16.msra.mxu0 %v874
        %888 = vmatprep.subr.bf16.mxu0 0
        %889 = vmatpush1.bf16.msra.mxu0 %v875
        %890 = vmatprep.subr.bf16.mxu0 0
        %891 = vmatpush1.bf16.msra.mxu0 %v876
        %892 = vmatprep.subr.bf16.mxu0 0
        %893 = vmatpush1.bf16.msra.mxu0 0
        %894 = vmatprep.subr.bf16.mxu0 0
        %895 = vmatpush1.bf16.msra.mxu0 0
        %896 = vmatprep.subr.bf16.mxu0 0
        %897 = vmatpush1.bf16.msra.mxu0 0
        %898 = vmatprep.subr.bf16.mxu0 0
        %899 = vmatpush1.bf16.msra.mxu0 0
        %900 = vmatprep.subr.bf16.mxu0 0
        %901 = vmatpush1.bf16.msra.mxu0 0
        %902 = vmatprep.subr.bf16.mxu0 0
        %903 = vmatpush1.bf16.msra.mxu0 0
        %904 = vmatprep.subr.bf16.mxu0 0
        %905 = vmatpush1.bf16.msra.mxu0 0
        %906 = vmatprep.subr.bf16.mxu0 0
        %907 = vmatpush1.bf16.msra.mxu0 0
        %908 = vmatprep.subr.bf16.mxu0 0
        %909 = vmatpush1.bf16.msra.mxu0 0
        %910 = vmatprep.subr.bf16.mxu0 0
        %911 = vmatpush1.bf16.msra.mxu0 0
        %912 = vmatprep.subr.bf16.mxu0 0
        %913 = vmatpush1.bf16.msra.mxu0 0
        %914 = vmatprep.subr.bf16.mxu0 0
        %915 = vmatpush1.bf16.msra.mxu0 0
        %916 = vmatprep.mubr.bf16.mxu0 0
        %917 = vmatmul.mubr.bf16.gmra.mrb[0].mxu0 %v882
        %v918 = vpop.f32.mrb[0].mxu0
        %v919 = vadd.f32 %v856, %v918
        %v920 = vpop.f32.mrb[0].mxu0
        %v921 = vpop.f32.mrb[0].mxu0
        %v922 = vpop.f32.mrb[0].mxu0
        %923 = vdwg.mxu0
        %v924 = vlaneseq
        %v925 = vshrl.u32 %v924, 7
        %v926 = vsub.s32 0, %v925
        %v927 = vrot.slane %v919, %v926
        %v928 = vadd.f32 %v838, %v927
        %v929 = vadd.f32 %v839, %v927
        %v930 = vmul.f32 %v928, %v615
        %v931 = vmul.f32 %v929, %v616
        %v934 = vrot.slane %v930, 7
        %v935 = vrot.slane %v931, 7
        %v936 = vsel %vm621, %v934, %v935
        %v939 = vsel %vm621, 0.0, %v934
        %v940 = vrot.slane %v930, 1
        %v941 = vrot.slane %v931, 1
        %v942 = vsel %vm628, %v940, %v941
        %v945 = vsel %vm628, %v941, 0.0
        %v946 = vld [vmem:[#allocation13] sm:$0xf]
        %v947 = vld [vmem:[#allocation13 + $0x4] sm:$0xf]
        %v948 = vld [vmem:[#allocation13 + $0x8] sm:$0xf]
        %v949 = vld [vmem:[#allocation13 + $0xc] sm:$0xf]
        %v950 = vld [vmem:[#allocation13 + $0x10] sm:$0xf]
        %v951 = vld [vmem:[#allocation13 + $0x14] sm:$0xf]
        %v952 = vld [vmem:[#allocation13 + $0x18] sm:$0xf]
        %v953 = vld [vmem:[#allocation13 + $0x1c] sm:$0xf]
        %v954 = vpack.c.bf16 %v936, %v939
        %s955 = scalar_lea.vmem [#allocation13], 32
        %v956 = vld [vmem:[%s955] sm:$0xf]
        %v957 = vld [vmem:[%s955 + $0x4] sm:$0xf]
        %v958 = vld [vmem:[%s955 + $0x8] sm:$0xf]
        %v959 = vld [vmem:[%s955 + $0xc] sm:$0xf]
        %v960 = vld [vmem:[%s955 + $0x10] sm:$0xf]
        %v961 = vld [vmem:[%s955 + $0x14] sm:$0xf]
        %v962 = vld [vmem:[%s955 + $0x18] sm:$0xf]
        %v963 = vld [vmem:[%s955 + $0x1c] sm:$0xf]
        %v964 = vpack.c.bf16 %v931, %v930
        %v973 = vunpack.c.l.b16 %v956
        %v974 = vunpack.c.l.b16 %v957
        %v975 = vunpack.c.l.b16 %v958
        %v976 = vunpack.c.l.b16 %v959
        %v977 = vunpack.c.l.b16 %v960
        %v978 = vunpack.c.l.b16 %v961
        %v979 = vunpack.c.l.b16 %v962
        %v980 = vunpack.c.l.b16 %v963
        %v981 = vpack.c.b16 %v974, %v973
        %v982 = vpack.c.b16 %v976, %v975
        %v983 = vpack.c.b16 %v978, %v977
        %v984 = vpack.c.b16 %v980, %v979
        %v990 = vsel %vm799, %v964, 0
        %992 = vmatprep.subr.bf16.mxu0 0
        %993 = vmatpush1.bf16.msra.mxu0 %v981
        %994 = vmatprep.subr.bf16.mxu0 0
        %995 = vmatpush1.bf16.msra.mxu0 %v982
        %996 = vmatprep.subr.bf16.mxu0 0
        %997 = vmatpush1.bf16.msra.mxu0 %v983
        %998 = vmatprep.subr.bf16.mxu0 0
        %999 = vmatpush1.bf16.msra.mxu0 %v984
        %1000 = vmatprep.subr.bf16.mxu0 0
        %1001 = vmatpush1.bf16.msra.mxu0 0
        %1002 = vmatprep.subr.bf16.mxu0 0
        %1003 = vmatpush1.bf16.msra.mxu0 0
        %1004 = vmatprep.subr.bf16.mxu0 0
        %1005 = vmatpush1.bf16.msra.mxu0 0
        %1006 = vmatprep.subr.bf16.mxu0 0
        %1007 = vmatpush1.bf16.msra.mxu0 0
        %1008 = vmatprep.subr.bf16.mxu0 0
        %1009 = vmatpush1.bf16.msra.mxu0 0
        %1010 = vmatprep.subr.bf16.mxu0 0
        %1011 = vmatpush1.bf16.msra.mxu0 0
        %1012 = vmatprep.subr.bf16.mxu0 0
        %1013 = vmatpush1.bf16.msra.mxu0 0
        %1014 = vmatprep.subr.bf16.mxu0 0
        %1015 = vmatpush1.bf16.msra.mxu0 0
        %1016 = vmatprep.subr.bf16.mxu0 0
        %1017 = vmatpush1.bf16.msra.mxu0 0
        %1018 = vmatprep.subr.bf16.mxu0 0
        %1019 = vmatpush1.bf16.msra.mxu0 0
        %1020 = vmatprep.subr.bf16.mxu0 0
        %1021 = vmatpush1.bf16.msra.mxu0 0
        %1022 = vmatprep.subr.bf16.mxu0 0
        %1023 = vmatpush1.bf16.msra.mxu0 0
        %1024 = vmatprep.mubr.bf16.mxu0 0
        %1025 = vmatmul.mubr.bf16.gmra.mrb[0].mxu0 %v990
        %v1026 = vpop.f32.mrb[0].mxu0
        %v1027 = vadd.f32 0.0, %v1026
        %v1028 = vpop.f32.mrb[0].mxu0
        %v1029 = vpop.f32.mrb[0].mxu0
        %v1030 = vadd.f32 0.0, %v1029
        %v1031 = vpop.f32.mrb[0].mxu0
        %1032 = vdwg.mxu0
        %v1041 = vunpack.c.l.b16 %v946
        %v1042 = vunpack.c.l.b16 %v947
        %v1043 = vunpack.c.l.b16 %v948
        %v1044 = vunpack.c.l.b16 %v949
        %v1045 = vunpack.c.l.b16 %v950
        %v1046 = vunpack.c.l.b16 %v951
        %v1047 = vunpack.c.l.b16 %v952
        %v1048 = vunpack.c.l.b16 %v953
        %v1049 = vpack.c.b16 %v1042, %v1041
        %v1050 = vpack.c.b16 %v1044, %v1043
        %v1051 = vpack.c.b16 %v1046, %v1045
        %v1052 = vpack.c.b16 %v1048, %v1047
        %v1058 = vsel %vm799, %v954, 0
        %1060 = vmatprep.subr.bf16.mxu0 0
        %1061 = vmatpush1.bf16.msra.mxu0 %v1049
        %1062 = vmatprep.subr.bf16.mxu0 0
        %1063 = vmatpush1.bf16.msra.mxu0 %v1050
        %1064 = vmatprep.subr.bf16.mxu0 0
        %1065 = vmatpush1.bf16.msra.mxu0 %v1051
        %1066 = vmatprep.subr.bf16.mxu0 0
        %1067 = vmatpush1.bf16.msra.mxu0 %v1052
        %1068 = vmatprep.subr.bf16.mxu0 0
        %1069 = vmatpush1.bf16.msra.mxu0 0
        %1070 = vmatprep.subr.bf16.mxu0 0
        %1071 = vmatpush1.bf16.msra.mxu0 0
        %1072 = vmatprep.subr.bf16.mxu0 0
        %1073 = vmatpush1.bf16.msra.mxu0 0
        %1074 = vmatprep.subr.bf16.mxu0 0
        %1075 = vmatpush1.bf16.msra.mxu0 0
        %1076 = vmatprep.subr.bf16.mxu0 0
        %1077 = vmatpush1.bf16.msra.mxu0 0
        %1078 = vmatprep.subr.bf16.mxu0 0
        %1079 = vmatpush1.bf16.msra.mxu0 0
        %1080 = vmatprep.subr.bf16.mxu0 0
        %1081 = vmatpush1.bf16.msra.mxu0 0
        %1082 = vmatprep.subr.bf16.mxu0 0
        %1083 = vmatpush1.bf16.msra.mxu0 0
        %1084 = vmatprep.subr.bf16.mxu0 0
        %1085 = vmatpush1.bf16.msra.mxu0 0
        %1086 = vmatprep.subr.bf16.mxu0 0
        %1087 = vmatpush1.bf16.msra.mxu0 0
        %1088 = vmatprep.subr.bf16.mxu0 0
        %1089 = vmatpush1.bf16.msra.mxu0 0
        %1090 = vmatprep.subr.bf16.mxu0 0
        %1091 = vmatpush1.bf16.msra.mxu0 0
        %1092 = vmatprep.mubr.bf16.mxu0 0
        %1093 = vmatmul.mubr.bf16.gmra.mrb[0].mxu0 %v1058
        %v1094 = vpop.f32.mrb[0].mxu0
        %v1095 = vadd.f32 %v1027, %v1094
        %v1096 = vpop.f32.mrb[0].mxu0
        %v1097 = vpop.f32.mrb[0].mxu0
        %v1098 = vadd.f32 %v1030, %v1097
        %v1099 = vpop.f32.mrb[0].mxu0
        %1100 = vdwg.mxu0
        %s1101 = scalar_lea.vmem [#allocation13], 64
        %v1102 = vld [vmem:[%s1101] sm:$0xf]
        %v1103 = vld [vmem:[%s1101 + $0x4] sm:$0xf]
        %v1104 = vld [vmem:[%s1101 + $0x8] sm:$0xf]
        %v1105 = vld [vmem:[%s1101 + $0xc] sm:$0xf]
        %v1106 = vld [vmem:[%s1101 + $0x10] sm:$0xf]
        %v1107 = vld [vmem:[%s1101 + $0x14] sm:$0xf]
        %v1108 = vld [vmem:[%s1101 + $0x18] sm:$0xf]
        %v1109 = vld [vmem:[%s1101 + $0x1c] sm:$0xf]
        %v1110 = vpack.c.bf16 %v945, %v942
        %v1119 = vunpack.c.l.b16 %v1102
        %v1120 = vunpack.c.l.b16 %v1103
        %v1121 = vunpack.c.l.b16 %v1104
        %v1122 = vunpack.c.l.b16 %v1105
        %v1123 = vunpack.c.l.b16 %v1106
        %v1124 = vunpack.c.l.b16 %v1107
        %v1125 = vunpack.c.l.b16 %v1108
        %v1126 = vunpack.c.l.b16 %v1109
        %v1127 = vpack.c.b16 %v1120, %v1119
        %v1128 = vpack.c.b16 %v1122, %v1121
        %v1129 = vpack.c.b16 %v1124, %v1123
        %v1130 = vpack.c.b16 %v1126, %v1125
        %v1136 = vsel %vm799, %v1110, 0
        %1138 = vmatprep.subr.bf16.mxu0 0
        %1139 = vmatpush1.bf16.msra.mxu0 %v1127
        %1140 = vmatprep.subr.bf16.mxu0 0
        %1141 = vmatpush1.bf16.msra.mxu0 %v1128
        %1142 = vmatprep.subr.bf16.mxu0 0
        %1143 = vmatpush1.bf16.msra.mxu0 %v1129
        %1144 = vmatprep.subr.bf16.mxu0 0
        %1145 = vmatpush1.bf16.msra.mxu0 %v1130
        %1146 = vmatprep.subr.bf16.mxu0 0
        %1147 = vmatpush1.bf16.msra.mxu0 0
        %1148 = vmatprep.subr.bf16.mxu0 0
        %1149 = vmatpush1.bf16.msra.mxu0 0
        %1150 = vmatprep.subr.bf16.mxu0 0
        %1151 = vmatpush1.bf16.msra.mxu0 0
        %1152 = vmatprep.subr.bf16.mxu0 0
        %1153 = vmatpush1.bf16.msra.mxu0 0
        %1154 = vmatprep.subr.bf16.mxu0 0
        %1155 = vmatpush1.bf16.msra.mxu0 0
        %1156 = vmatprep.subr.bf16.mxu0 0
        %1157 = vmatpush1.bf16.msra.mxu0 0
        %1158 = vmatprep.subr.bf16.mxu0 0
        %1159 = vmatpush1.bf16.msra.mxu0 0
        %1160 = vmatprep.subr.bf16.mxu0 0
        %1161 = vmatpush1.bf16.msra.mxu0 0
        %1162 = vmatprep.subr.bf16.mxu0 0
        %1163 = vmatpush1.bf16.msra.mxu0 0
        %1164 = vmatprep.subr.bf16.mxu0 0
        %1165 = vmatpush1.bf16.msra.mxu0 0
        %1166 = vmatprep.subr.bf16.mxu0 0
        %1167 = vmatpush1.bf16.msra.mxu0 0
        %1168 = vmatprep.subr.bf16.mxu0 0
        %1169 = vmatpush1.bf16.msra.mxu0 0
        %1170 = vmatprep.mubr.bf16.mxu0 0
        %1171 = vmatmul.mubr.bf16.gmra.mrb[0].mxu0 %v1136
        %v1172 = vpop.f32.mrb[0].mxu0
        %v1173 = vadd.f32 0.0, %v1172
        %v1174 = vpop.f32.mrb[0].mxu0
        %v1175 = vpop.f32.mrb[0].mxu0
        %v1176 = vadd.f32 0.0, %v1175
        %v1177 = vpop.f32.mrb[0].mxu0
        %1178 = vdwg.mxu0
        %v1179 = vadd.f32 %v1095, %v1173
        %v1180 = vadd.f32 %v1098, %v1176
        %v1181 = vld [vmem:[#allocation15] sm:$0x1]
        %v1183 = vlaneseq
        %v1184 = vshrl.u32 %v1183, 7
        %v1185 = vsub.s32 0, %v1184
        %v1186 = vrot.slane %v1181, %v1185
        %v1188 = vadd.f32 %v1179, %v1186
        %v1189 = vadd.f32 %v1180, %v1186
        %v1190 = vmul.f32 %v1188, %v1188
        %v1191 = vmul.f32 %v1189, %v1189
        %v1192 = vsel %vm799, %v1190, 0.0
        %1193 = vadd.xlane.f32.xlu0 %v1192
        %v1194 = vpop.xlane.xlu0 %1193
        %v1195 = vsel %vm799, %v1191, 0.0
        %1196 = vadd.xlane.f32.xlu0 %v1195
        %v1197 = vpop.xlane.xlu0 %1196
        %v1198 = vmul.f32 %v1194, %v806
        %v1199 = vmul.f32 %v1197, %v806
        %v1200 = vadd.f32 %v1198, 1e-06
        %v1201 = vadd.f32 %v1199, 1e-06
        %v1202 = vrsqrt.pop %v1200
        %v1203 = vrsqrt.pop %v1201
        %v1204 = vmul.f32 %v1188, %v1202
        %v1205 = vmul.f32 %v1189, %v1203
        %v1206 = vld [vmem:[#allocation16] sm:$0x1]
        %v1208 = vlaneseq
        %v1209 = vshrl.u32 %v1208, 7
        %v1210 = vsub.s32 0, %v1209
        %v1211 = vrot.slane %v1206, %v1210
        %v1213 = vmul.f32 %v1204, %v1211
        %v1214 = vmul.f32 %v1205, %v1211
        %v1215 = vxor.u32 %v1213, 2147483648
        %v1216 = vxor.u32 %v1214, 2147483648
        %v1217 = vmul.f32 %v1215, 1.442695
        %v1218 = vpow.pop %v1217
        %v1219 = vmul.f32 %v1216, 1.442695
        %v1220 = vpow.pop %v1219
        %v1221 = vadd.f32 %v1218, 1.0
        %v1222 = vadd.f32 %v1220, 1.0
        %v1223 = vrcp.pop %v1221
        %v1224 = vmul.f32 1.0, %v1223
        %v1225 = vrcp.pop %v1222
        %v1226 = vmul.f32 1.0, %v1225
        %v1227 = vmul.f32 %v1213, %v1224
        %v1228 = vmul.f32 %v1214, %v1226
        %v1229 = vmul.f32 %v1227, %v615
        %v1230 = vmul.f32 %v1228, %v616
        %v1231 = vld [vmem:[#allocation21] sm:$0xf]
        %v1232 = vld [vmem:[#allocation22] sm:$0x1]
        %v1234 = vlaneseq
        %v1235 = vshrl.u32 %v1234, 7
        %v1236 = vsub.s32 0, %v1235
        %v1237 = vrot.slane %v1232, %v1236
        %v1240 = vsel %vm644, %v1231, 0
        %1242 = vmatprep.subr.bf16.mxu0 0
        %1243 = vmatpush1.bf16.msra.mxu0 %v1240
        %1244 = vmatprep.subr.bf16.mxu0 0
        %1245 = vmatpush1.bf16.msra.mxu0 0
        %1246 = vmatprep.subr.bf16.mxu0 0
        %1247 = vmatpush1.bf16.msra.mxu0 0
        %1248 = vmatprep.subr.bf16.mxu0 0
        %1249 = vmatpush1.bf16.msra.mxu0 0
        %1250 = vmatprep.subr.bf16.mxu0 0
        %1251 = vmatpush1.bf16.msra.mxu0 0
        %1252 = vmatprep.subr.bf16.mxu0 0
        %1253 = vmatpush1.bf16.msra.mxu0 0
        %1254 = vmatprep.subr.bf16.mxu0 0
        %1255 = vmatpush1.bf16.msra.mxu0 0
        %1256 = vmatprep.subr.bf16.mxu0 0
        %1257 = vmatpush1.bf16.msra.mxu0 0
        %1258 = vmatprep.subr.bf16.mxu0 0
        %1259 = vmatpush1.bf16.msra.mxu0 0
        %1260 = vmatprep.subr.bf16.mxu0 0
        %1261 = vmatpush1.bf16.msra.mxu0 0
        %1262 = vmatprep.subr.bf16.mxu0 0
        %1263 = vmatpush1.bf16.msra.mxu0 0
        %1264 = vmatprep.subr.bf16.mxu0 0
        %1265 = vmatpush1.bf16.msra.mxu0 0
        %1266 = vmatprep.subr.bf16.mxu0 0
        %1267 = vmatpush1.bf16.msra.mxu0 0
        %1268 = vmatprep.subr.bf16.mxu0 0
        %1269 = vmatpush1.bf16.msra.mxu0 0
        %1270 = vmatprep.subr.bf16.mxu0 0
        %1271 = vmatpush1.bf16.msra.mxu0 0
        %1272 = vmatprep.subr.bf16.mxu0 0
        %1273 = vmatpush1.bf16.msra.mxu0 0
        %1274 = vmatprep.mubr.bf16.mxu0 0
        %1275 = vmatmul.mubr.bf16.gmra.mrb[0].mxu0 %v642
        %v1276 = vpop.f32.mrb[0].mxu0
        %v1277 = vadd.f32 %v1237, %v1276
        %v1278 = vpop.f32.mrb[0].mxu0
        %v1279 = vpop.f32.mrb[0].mxu0
        %v1280 = vadd.f32 %v1237, %v1279
        %v1281 = vpop.f32.mrb[0].mxu0
        %1282 = vdwg.mxu0
        %v1283 = vadd.f32 %v1229, %v1277
        %v1284 = vadd.f32 %v1230, %v1280
        %v1285 = vpack.c.bf16 %v1284, %v1283
        %v1287 = vunpack.c.l.b16 %v1285
        %v1288 = vunpack.c.h.b16 %v1285
        %v1289 = vpack.c.b16 %v1287, %v1287
        %v1290 = vpack.c.b16 %v1288, %v1288
        %vm1293 = vcmask 519168
        %1294 = vst.msk [vmem:[%s601] sm:$0xf] %vm1293, %v1289
        %1295 = vst.msk [vmem:[%s601 + $0x4] sm:$0xf] %vm1293, %v1290
        %s1296 = sand.u32 %s312, 1
        %s1297 = scalar_lea.sflag [#allocation6], %s1296
        %s1298 = sand.u32 %s312, 1
        %s1299 = smul.addr %s1298, 8
        %s1300 = scalar_lea.vmem [#allocation24], %s1299
        // Predicated region
        $region117: #{tpu_custom_call.1} parent=67 // pred_check
          %p1301 = pneg %p322
        $region118: #{tpu_custom_call.1} parent=67 // pred_check_branch
          %1303 = sbr.rel (%p1301) target = $region120
        $region119: #{tpu_custom_call.1} parent=67 // pred_region
          %s1305 = ssub.s32 128, 128
          %1306 = vsyncadd %s1297, %s1305
          %s1307 = smul.addr %s42, 2
          %s1308 = smul.addr %s1307, 64
          %s1309 = scalar_lea.hbm %s13, %s1308
          %s1310 = sshll.u32 %s1300, 4
          %s1311 = int_to_ptr.vmem [resolvable:$true] %s1310
          %1316 = dma.vmem_to_hbm [thread:$0]  %s1311, 128, %s1309, %s1297, 64, 64, 4
        $region120: #{tpu_custom_call.1} parent=67 // pred_fallthru
          _
      $region68: #{tpu_custom_call.1} parent=5 // pred_fallthru
        _
      %p1317 = scmp.le.s32.totalorder 2, %s37
      // Predicated region
      $region121: #{tpu_custom_call.1} parent=5 // pred_check
        %p1318 = pneg %p1317
      $region122: #{tpu_custom_call.1} parent=5 // pred_check_branch
        %1320 = sbr.rel (%p1318) target = $region124
      $region123: #{tpu_custom_call.1} parent=5 // pred_region
        %s1321 = ssub.s32 %s37, 2
        // Predicated region
        $region125: #{tpu_custom_call.1} parent=123 // pred_check
          %p1322 = pneg %p328
        $region126: #{tpu_custom_call.1} parent=123 // pred_check_branch
          %1324 = sbr.rel (%p1322) target = $region128
        $region127: #{tpu_custom_call.1} parent=123 // pred_region
          %s1325 = sand.u32 %s313, 1
          %s1326 = scalar_lea.sflag [#allocation6], %s1325
          %s1327 = sand.u32 %s313, 1
          %s1328 = smul.addr %s1327, 8
          %s1329 = scalar_lea.vmem [#allocation24], %s1328
          %1330 = dma.done %s1326, 128
        $region128: #{tpu_custom_call.1} parent=123 // pred_fallthru
          _
      $region124: #{tpu_custom_call.1} parent=5 // pred_fallthru
        _
    $region6: #{tpu_custom_call.1} parent=1 // loop_footer
      %s41 = sadd.s32 1, %s37
    $region7: #{tpu_custom_call.1} parent=1 // loop_footer_branch
      %36 = sbr.rel target = $region3
    $region8: #{tpu_custom_call.1} parent=1 // loop_exit
      _
    %1331 = vsyncpa [#allocation5], 1
    %s1332 = scalar_lea.sflag [#allocation5], 1
    %1333 = vsyncpa %s1332, 1
    %1334 = vsyncpa [#allocation8], 1
    %s1335 = scalar_lea.sflag [#allocation8], 1
    %1336 = vsyncpa %s1335, 1
    %1337 = vsyncpa [#allocation11], 1
    %1338 = vsyncpa [#allocation14], 1
    %1339 = vsyncpa [#allocation17], 1
    %1340 = vsyncpa [#allocation20], 1
    %1341 = vsyncpa [#allocation23], 1
    %1342 = vsyncpa [#allocation6], 1
    %s1343 = scalar_lea.sflag [#allocation6], 1
    %1344 = vsyncpa %s1343, 1

</llo_original>
